<compile_context>
chip_gen: v6e
topology: v6e:2x2x1
jax: 0.10.0
libtpu: 0.0.40
codegen_flags: <defaults>
</compile_context>

<pallas_src>
import functools

import jax
import jax.numpy as jnp
from jax.experimental import pallas as pl
from jax.experimental.pallas import tpu as pltpu

HALO = 128   # conv stack only needs 3 samples of halo; 128 keeps every
             # in-kernel slice / concat on a (8,128) tile boundary.
LEAK = 0.2


def noisegen_kernel(x_ref, halo_ref, n_ref,
                    w1_ref, b1_ref, w2_ref, b2_ref, w3_ref, b3_ref,
                    o_ref, *, seq_len):
    """One (batch, time-tile) grid step.

    x_ref    : (1, C, tile_t)      main tile, channels-first
    halo_ref : (1, 1, C, 2*HALO)   [left halo | right halo] for this tile
    n_ref    : (1, nb, tile_t)     standard-normal noise for this tile
    w*_ref   : (3, Cout, Cin)      conv taps k=0,1,2 (weight-normed)
    b*_ref   : (Cout, 1)
    o_ref    : (1, 1, tile_t)
    """
    tile_t = x_ref.shape[2]
    hw = halo_ref.shape[3] // 2
    wp = tile_t + 2 * hw
    j = pl.program_id(1)

    halo = halo_ref[0, 0]                                     # (C, 2*hw)
    x_win = jnp.concatenate(
        [halo[:, :hw], x_ref[0], halo[:, hw:]], axis=1)       # (C, wp)

    # Global sample index of every window column (hoisted once, reused by both
    # hidden-layer masks).  Columns outside [0, seq_len) must be exactly zero
    # between layers to reproduce Conv1d's zero padding at the sequence ends.
    g = j * tile_t - hw + jax.lax.broadcasted_iota(jnp.int32, (1, wp), 1)

    def conv3_valid(h, w_ref, b_ref):
        # k=3 'valid' conv, channels-first: (Cin, W) -> (Cout, W - 2).
        w_len = h.shape[1]
        y = (jnp.dot(w_ref[0], h[:, 0:w_len - 2], preferred_element_type=jnp.float32)
             + jnp.dot(w_ref[1], h[:, 1:w_len - 1], preferred_element_type=jnp.float32)
             + jnp.dot(w_ref[2], h[:, 2:w_len], preferred_element_type=jnp.float32))
        return y + b_ref[...]

    def leaky_and_mask(y, lo):
        # y covers window columns [lo, lo + width); zero everything outside the
        # real sequence so the next layer sees Conv1d's true zero padding.
        width = y.shape[1]
        gy = g[:, lo:lo + width]
        ok = jnp.logical_and(gy >= 0, gy < seq_len)
        return jnp.where(ok, jnp.maximum(y, LEAK * y), 0.0)

    h = conv3_valid(x_win, w1_ref, b1_ref)        # window cols [1, wp-1)
    h = leaky_and_mask(h, 1)
    h = conv3_valid(h, w2_ref, b2_ref)            # window cols [2, wp-2)
    h = leaky_and_mask(h, 2)
    h = conv3_valid(h, w3_ref, b3_ref)            # window cols [3, wp-3)

    # Keep the exactly-correct center tile: window cols [hw, hw + tile_t).
    amp = jax.nn.sigmoid(h[:, hw - 3:hw - 3 + tile_t] - 5.0)  # (nb, tile_t)

    # TODO(synk): generate the standard-normal noise in-kernel
    # (pltpu.prng_seed + pltpu.prng_random_bits) to drop this HBM stream.
    noise = n_ref[0] * amp
    o_ref[0] = jnp.sum(noise, axis=0, keepdims=True)          # lane-dense (1, tile_t)


def _round_up(n, m):
    return -(-n // m) * m


def make_params(key, n_channels, noise_bands=4):
    """Deterministic weight-normed Conv1d params, packed for the kernel.

    Returns [(w, b)] x 3 with w: (3, Cout, Cin) (tap-major) and b: (Cout, 1).
    Weight norm (torch default dim=0): w = g * v / ||v||, norm over (Cin, k).
    """
    chans, c = [], n_channels
    for _ in range(3):
        co = max(c // 2, noise_bands)
        chans.append((c, co))
        c = co

    params = []
    for ci, co in chans:
        key, k1, k2, k3 = jax.random.split(key, 4)
        v = jax.random.normal(k1, (co, ci, 3), jnp.float32) * 0.1
        g = jax.random.uniform(k2, (co,), jnp.float32, minval=0.5, maxval=1.5)
        b = jax.random.normal(k3, (co,), jnp.float32) * 0.1
        vnorm = jnp.sqrt(jnp.sum(v * v, axis=(1, 2), keepdims=True))
        w = g[:, None, None] * v / vnorm                # (Cout, Cin, 3), torch layout
        w_taps = jnp.transpose(w, (2, 0, 1))            # (3, Cout, Cin)
        params.append((w_taps, b.reshape(co, 1)))
    return params


@functools.partial(jax.jit, static_argnames=("tile_t",))
def noise_generator(x, noise_key, w1, b1, w2, b2, w3, b3, *, tile_t=8192):
    """x: (B, C, T) channels-first (same layout as the PyTorch module).

    Returns (B, 1, T)."""
    B, C, T = x.shape
    nb = b3.shape[0]

    tile_t = min(_round_up(tile_t, 128), _round_up(T, 128))
    n_t = pl.cdiv(T, tile_t)
    Tp = n_t * tile_t

    # Main tiles, padded to a whole number of tiles ...
    xp = jnp.pad(x, ((0, 0), (0, 0), (0, Tp - T)))
    # ... and per-tile halos: columns [j*tile_t - HALO, j*tile_t) and
    # [(j+1)*tile_t, (j+1)*tile_t + HALO), zero outside the sequence.
    xh = jnp.pad(x, ((0, 0), (0, 0), (HALO, (Tp - T) + HALO)))
    col = jnp.concatenate([jnp.arange(HALO), tile_t + HALO + jnp.arange(HALO)])
    idx = (jnp.arange(n_t) * tile_t)[:, None] + col[None, :]          # (n_t, 2*HALO)
    halos = jnp.transpose(jnp.take(xh, idx, axis=2), (0, 2, 1, 3))    # (B, n_t, C, 2*HALO)

    # Standard-normal noise (torch.randn_like), generated directly in kernel
    # layout -- no transpose copy.
    noise = jax.random.normal(noise_key, (B, nb, Tp), jnp.float32)

    full = lambda a: pl.BlockSpec(a.shape, lambda b, j: (0,) * a.ndim)

    out = pl.pallas_call(
        functools.partial(noisegen_kernel, seq_len=T),
        out_shape=jax.ShapeDtypeStruct((B, 1, Tp), jnp.float32),
        grid=(B, n_t),
        in_specs=[
            pl.BlockSpec((1, C, tile_t), lambda b, j: (b, 0, j)),
            pl.BlockSpec((1, 1, C, 2 * HALO), lambda b, j: (b, j, 0, 0)),
            pl.BlockSpec((1, nb, tile_t), lambda b, j: (b, 0, j)),
            full(w1), full(b1), full(w2), full(b2), full(w3), full(b3),
        ],
        out_specs=pl.BlockSpec((1, 1, tile_t), lambda b, j: (b, 0, j)),
        compiler_params=pltpu.CompilerParams(
            dimension_semantics=("parallel", "parallel"),
            vmem_limit_bytes=32 * 1024 * 1024),
    )(xp, halos, noise, w1, b1, w2, b2, w3, b3)

    return out[:, :, :T]


if __name__ == "__main__":
    n_channels, noise_bands = 16, 4
    B, T = 2, 300            # T deliberately not a multiple of the tile size

    key = jax.random.PRNGKey(0)
    kp, kx, kn = jax.random.split(key, 3)

    (w1, b1), (w2, b2), (w3, b3) = make_params(kp, n_channels, noise_bands)
    x = jax.random.normal(kx, (B, n_channels, T), jnp.float32)

    # small tile to exercise the multi-tile / halo / boundary-mask path
    out = noise_generator(x, kn, w1, b1, w2, b2, w3, b3, tile_t=128)
    jax.block_until_ready(out)
    assert out.shape == (B, 1, T), out.shape
    assert bool(jnp.all(jnp.isfinite(out)))
    print("KERNEL_OK")
</pallas_src>

<mosaic_0001>
module attributes {stable_mosaic.version = 11 : i64} {
  func.func @noisegen_kernel(%arg0: i32, %arg1: i32, %arg2: memref<1x16x128xf32, #tpu.memory_space<vmem>>, %arg3: memref<1x1x16x256xf32, #tpu.memory_space<vmem>>, %arg4: memref<1x4x128xf32, #tpu.memory_space<vmem>>, %arg5: memref<3x8x16xf32, #tpu.memory_space<vmem>>, %arg6: memref<8x1xf32, #tpu.memory_space<vmem>>, %arg7: memref<3x4x8xf32, #tpu.memory_space<vmem>>, %arg8: memref<4x1xf32, #tpu.memory_space<vmem>>, %arg9: memref<3x4x4xf32, #tpu.memory_space<vmem>>, %arg10: memref<4x1xf32, #tpu.memory_space<vmem>>, %arg11: memref<1x1x128xf32, #tpu.memory_space<vmem>>) attributes {dimension_semantics = [#tpu.dimension_semantics<parallel>, #tpu.dimension_semantics<parallel>], iteration_bounds = array<i64: 2, 3>, scalar_prefetch = 0 : i64, scratch_operands = 0 : i64, tpu.core_type = #tpu.core_type<tc>, window_params = [{transform_indices = @transform_0, window_bounds = array<i64: 1, 16, 128>}, {transform_indices = @transform_1, window_bounds = array<i64: 1, 1, 16, 256>}, {transform_indices = @transform_2, window_bounds = array<i64: 1, 4, 128>}, {pipeline_mode = #tpu.pipeline_mode<synchronous>, transform_indices = @transform_3, window_bounds = array<i64: 3, 8, 16>}, {pipeline_mode = #tpu.pipeline_mode<synchronous>, transform_indices = @transform_4, window_bounds = array<i64: 8, 1>}, {pipeline_mode = #tpu.pipeline_mode<synchronous>, transform_indices = @transform_5, window_bounds = array<i64: 3, 4, 8>}, {pipeline_mode = #tpu.pipeline_mode<synchronous>, transform_indices = @transform_6, window_bounds = array<i64: 4, 1>}, {pipeline_mode = #tpu.pipeline_mode<synchronous>, transform_indices = @transform_7, window_bounds = array<i64: 3, 4, 4>}, {pipeline_mode = #tpu.pipeline_mode<synchronous>, transform_indices = @transform_8, window_bounds = array<i64: 4, 1>}, {transform_indices = @transform_9, window_bounds = array<i64: 1, 1, 128>}]} {
    %c0 = arith.constant 0 : index
    %c0_0 = arith.constant 0 : index
    %c0_1 = arith.constant 0 : index
    %c0_2 = arith.constant 0 : index
    %0 = vector.load %arg3[%c0, %c0_0, %c0_1, %c0_2] : memref<1x1x16x256xf32, #tpu.memory_space<vmem>>, vector<1x1x16x256xf32>
    %1 = vector.shape_cast %0 : vector<1x1x16x256xf32> to vector<16x256xf32>
    %2 = vector.extract_strided_slice %1 {offsets = [0, 0], sizes = [16, 128], strides = [1, 1]} : vector<16x256xf32> to vector<16x128xf32>
    %c0_3 = arith.constant 0 : index
    %c0_4 = arith.constant 0 : index
    %c0_5 = arith.constant 0 : index
    %3 = vector.load %arg2[%c0_3, %c0_4, %c0_5] : memref<1x16x128xf32, #tpu.memory_space<vmem>>, vector<1x16x128xf32>
    %4 = vector.shape_cast %3 : vector<1x16x128xf32> to vector<16x128xf32>
    %5 = vector.extract_strided_slice %1 {offsets = [0, 128], sizes = [16, 128], strides = [1, 1]} : vector<16x256xf32> to vector<16x128xf32>
    %6 = tpu.concatenate %2, %4, %5 in 1 : vector<16x128xf32>, vector<16x128xf32>, vector<16x128xf32> -> vector<16x384xf32>
    %c128_i32 = arith.constant 128 : i32
    %7 = arith.muli %arg1, %c128_i32 : i32
    %c128_i32_6 = arith.constant 128 : i32
    %8 = arith.subi %7, %c128_i32_6 : i32
    %9 = tpu.iota {dimensions = array<i32: 1>} : vector<1x384xi32>
    %10 = vector.broadcast %8 : i32 to vector<1x384xi32>
    %11 = arith.addi %10, %9 : vector<1x384xi32>
    %c0_7 = arith.constant 0 : index
    %c0_8 = arith.constant 0 : index
    %c0_9 = arith.constant 0 : index
    %12 = vector.load %arg5[%c0_7, %c0_8, %c0_9] : memref<3x8x16xf32, #tpu.memory_space<vmem>>, vector<1x8x16xf32>
    %13 = vector.shape_cast %12 : vector<1x8x16xf32> to vector<8x16xf32>
    %14 = vector.extract_strided_slice %6 {offsets = [0, 0], sizes = [16, 382], strides = [1, 1]} : vector<16x384xf32> to vector<16x382xf32>
    %cst = arith.constant dense<0.000000e+00> : vector<8x382xf32>
    %15 = tpu.matmul %13, %14, %cst {dimension_numbers = #tpu.dot_dimension_numbers<[1], [0], [0], [1], [0, 0, 1, 1], [], []>} : vector<8x16xf32>, vector<16x382xf32>, vector<8x382xf32> -> vector<8x382xf32>
    %c1 = arith.constant 1 : index
    %c0_10 = arith.constant 0 : index
    %c0_11 = arith.constant 0 : index
    %16 = vector.load %arg5[%c1, %c0_10, %c0_11] : memref<3x8x16xf32, #tpu.memory_space<vmem>>, vector<1x8x16xf32>
    %17 = vector.shape_cast %16 : vector<1x8x16xf32> to vector<8x16xf32>
    %18 = vector.extract_strided_slice %6 {offsets = [0, 1], sizes = [16, 382], strides = [1, 1]} : vector<16x384xf32> to vector<16x382xf32>
    %cst_12 = arith.constant dense<0.000000e+00> : vector<8x382xf32>
    %19 = tpu.matmul %17, %18, %cst_12 {dimension_numbers = #tpu.dot_dimension_numbers<[1], [0], [0], [1], [0, 0, 1, 1], [], []>} : vector<8x16xf32>, vector<16x382xf32>, vector<8x382xf32> -> vector<8x382xf32>
    %20 = arith.addf %15, %19 : vector<8x382xf32>
    %c2 = arith.constant 2 : index
    %c0_13 = arith.constant 0 : index
    %c0_14 = arith.constant 0 : index
    %21 = vector.load %arg5[%c2, %c0_13, %c0_14] : memref<3x8x16xf32, #tpu.memory_space<vmem>>, vector<1x8x16xf32>
    %22 = vector.shape_cast %21 : vector<1x8x16xf32> to vector<8x16xf32>
    %23 = vector.extract_strided_slice %6 {offsets = [0, 2], sizes = [16, 382], strides = [1, 1]} : vector<16x384xf32> to vector<16x382xf32>
    %cst_15 = arith.constant dense<0.000000e+00> : vector<8x382xf32>
    %24 = tpu.matmul %22, %23, %cst_15 {dimension_numbers = #tpu.dot_dimension_numbers<[1], [0], [0], [1], [0, 0, 1, 1], [], []>} : vector<8x16xf32>, vector<16x382xf32>, vector<8x382xf32> -> vector<8x382xf32>
    %25 = arith.addf %20, %24 : vector<8x382xf32>
    %c0_16 = arith.constant 0 : index
    %c0_17 = arith.constant 0 : index
    %26 = vector.load %arg6[%c0_16, %c0_17] : memref<8x1xf32, #tpu.memory_space<vmem>>, vector<8x1xf32>
    %27 = vector.broadcast %26 : vector<8x1xf32> to vector<8x382xf32>
    %28 = arith.addf %25, %27 : vector<8x382xf32>
    %29 = vector.extract_strided_slice %11 {offsets = [0, 1], sizes = [1, 382], strides = [1, 1]} : vector<1x384xi32> to vector<1x382xi32>
    %c0_i32 = arith.constant 0 : i32
    %30 = vector.broadcast %c0_i32 : i32 to vector<1x382xi32>
    %31 = arith.cmpi sge, %29, %30 : vector<1x382xi32>
    %c300_i32 = arith.constant 300 : i32
    %32 = vector.broadcast %c300_i32 : i32 to vector<1x382xi32>
    %33 = arith.cmpi slt, %29, %32 : vector<1x382xi32>
    %34 = arith.andi %31, %33 : vector<1x382xi1>
    %cst_18 = arith.constant 2.000000e-01 : f32
    %35 = vector.broadcast %cst_18 : f32 to vector<8x382xf32>
    %36 = arith.mulf %35, %28 : vector<8x382xf32>
    %37 = arith.maximumf %28, %36 : vector<8x382xf32>
    %cst_19 = arith.constant 0.000000e+00 : f32
    %38 = vector.shape_cast %34 : vector<1x382xi1> to vector<1x382xi1>
    %39 = vector.broadcast %38 : vector<1x382xi1> to vector<8x382xi1>
    %40 = vector.broadcast %cst_19 : f32 to vector<8x382xf32>
    %41 = arith.select %39, %37, %40 : vector<8x382xi1>, vector<8x382xf32>
    %c0_20 = arith.constant 0 : index
    %c0_21 = arith.constant 0 : index
    %c0_22 = arith.constant 0 : index
    %42 = vector.load %arg7[%c0_20, %c0_21, %c0_22] : memref<3x4x8xf32, #tpu.memory_space<vmem>>, vector<1x4x8xf32>
    %43 = vector.shape_cast %42 : vector<1x4x8xf32> to vector<4x8xf32>
    %44 = vector.extract_strided_slice %41 {offsets = [0, 0], sizes = [8, 380], strides = [1, 1]} : vector<8x382xf32> to vector<8x380xf32>
    %cst_23 = arith.constant dense<0.000000e+00> : vector<4x380xf32>
    %45 = tpu.matmul %43, %44, %cst_23 {dimension_numbers = #tpu.dot_dimension_numbers<[1], [0], [0], [1], [0, 0, 1, 1], [], []>} : vector<4x8xf32>, vector<8x380xf32>, vector<4x380xf32> -> vector<4x380xf32>
    %c1_24 = arith.constant 1 : index
    %c0_25 = arith.constant 0 : index
    %c0_26 = arith.constant 0 : index
    %46 = vector.load %arg7[%c1_24, %c0_25, %c0_26] : memref<3x4x8xf32, #tpu.memory_space<vmem>>, vector<1x4x8xf32>
    %47 = vector.shape_cast %46 : vector<1x4x8xf32> to vector<4x8xf32>
    %48 = vector.extract_strided_slice %41 {offsets = [0, 1], sizes = [8, 380], strides = [1, 1]} : vector<8x382xf32> to vector<8x380xf32>
    %cst_27 = arith.constant dense<0.000000e+00> : vector<4x380xf32>
    %49 = tpu.matmul %47, %48, %cst_27 {dimension_numbers = #tpu.dot_dimension_numbers<[1], [0], [0], [1], [0, 0, 1, 1], [], []>} : vector<4x8xf32>, vector<8x380xf32>, vector<4x380xf32> -> vector<4x380xf32>
    %50 = arith.addf %45, %49 : vector<4x380xf32>
    %c2_28 = arith.constant 2 : index
    %c0_29 = arith.constant 0 : index
    %c0_30 = arith.constant 0 : index
    %51 = vector.load %arg7[%c2_28, %c0_29, %c0_30] : memref<3x4x8xf32, #tpu.memory_space<vmem>>, vector<1x4x8xf32>
    %52 = vector.shape_cast %51 : vector<1x4x8xf32> to vector<4x8xf32>
    %53 = vector.extract_strided_slice %41 {offsets = [0, 2], sizes = [8, 380], strides = [1, 1]} : vector<8x382xf32> to vector<8x380xf32>
    %cst_31 = arith.constant dense<0.000000e+00> : vector<4x380xf32>
    %54 = tpu.matmul %52, %53, %cst_31 {dimension_numbers = #tpu.dot_dimension_numbers<[1], [0], [0], [1], [0, 0, 1, 1], [], []>} : vector<4x8xf32>, vector<8x380xf32>, vector<4x380xf32> -> vector<4x380xf32>
    %55 = arith.addf %50, %54 : vector<4x380xf32>
    %c0_32 = arith.constant 0 : index
    %c0_33 = arith.constant 0 : index
    %56 = vector.load %arg8[%c0_32, %c0_33] : memref<4x1xf32, #tpu.memory_space<vmem>>, vector<4x1xf32>
    %57 = vector.broadcast %56 : vector<4x1xf32> to vector<4x380xf32>
    %58 = arith.addf %55, %57 : vector<4x380xf32>
    %59 = vector.extract_strided_slice %11 {offsets = [0, 2], sizes = [1, 380], strides = [1, 1]} : vector<1x384xi32> to vector<1x380xi32>
    %c0_i32_34 = arith.constant 0 : i32
    %60 = vector.broadcast %c0_i32_34 : i32 to vector<1x380xi32>
    %61 = arith.cmpi sge, %59, %60 : vector<1x380xi32>
    %c300_i32_35 = arith.constant 300 : i32
    %62 = vector.broadcast %c300_i32_35 : i32 to vector<1x380xi32>
    %63 = arith.cmpi slt, %59, %62 : vector<1x380xi32>
    %64 = arith.andi %61, %63 : vector<1x380xi1>
    %cst_36 = arith.constant 2.000000e-01 : f32
    %65 = vector.broadcast %cst_36 : f32 to vector<4x380xf32>
    %66 = arith.mulf %65, %58 : vector<4x380xf32>
    %67 = arith.maximumf %58, %66 : vector<4x380xf32>
    %cst_37 = arith.constant 0.000000e+00 : f32
    %68 = vector.shape_cast %64 : vector<1x380xi1> to vector<1x380xi1>
    %69 = vector.broadcast %68 : vector<1x380xi1> to vector<4x380xi1>
    %70 = vector.broadcast %cst_37 : f32 to vector<4x380xf32>
    %71 = arith.select %69, %67, %70 : vector<4x380xi1>, vector<4x380xf32>
    %c0_38 = arith.constant 0 : index
    %c0_39 = arith.constant 0 : index
    %c0_40 = arith.constant 0 : index
    %72 = vector.load %arg9[%c0_38, %c0_39, %c0_40] : memref<3x4x4xf32, #tpu.memory_space<vmem>>, vector<1x4x4xf32>
    %73 = vector.shape_cast %72 : vector<1x4x4xf32> to vector<4x4xf32>
    %74 = vector.extract_strided_slice %71 {offsets = [0, 0], sizes = [4, 378], strides = [1, 1]} : vector<4x380xf32> to vector<4x378xf32>
    %cst_41 = arith.constant dense<0.000000e+00> : vector<4x378xf32>
    %75 = tpu.matmul %73, %74, %cst_41 {dimension_numbers = #tpu.dot_dimension_numbers<[1], [0], [0], [1], [0, 0, 1, 1], [], []>} : vector<4x4xf32>, vector<4x378xf32>, vector<4x378xf32> -> vector<4x378xf32>
    %c1_42 = arith.constant 1 : index
    %c0_43 = arith.constant 0 : index
    %c0_44 = arith.constant 0 : index
    %76 = vector.load %arg9[%c1_42, %c0_43, %c0_44] : memref<3x4x4xf32, #tpu.memory_space<vmem>>, vector<1x4x4xf32>
    %77 = vector.shape_cast %76 : vector<1x4x4xf32> to vector<4x4xf32>
    %78 = vector.extract_strided_slice %71 {offsets = [0, 1], sizes = [4, 378], strides = [1, 1]} : vector<4x380xf32> to vector<4x378xf32>
    %cst_45 = arith.constant dense<0.000000e+00> : vector<4x378xf32>
    %79 = tpu.matmul %77, %78, %cst_45 {dimension_numbers = #tpu.dot_dimension_numbers<[1], [0], [0], [1], [0, 0, 1, 1], [], []>} : vector<4x4xf32>, vector<4x378xf32>, vector<4x378xf32> -> vector<4x378xf32>
    %80 = arith.addf %75, %79 : vector<4x378xf32>
    %c2_46 = arith.constant 2 : index
    %c0_47 = arith.constant 0 : index
    %c0_48 = arith.constant 0 : index
    %81 = vector.load %arg9[%c2_46, %c0_47, %c0_48] : memref<3x4x4xf32, #tpu.memory_space<vmem>>, vector<1x4x4xf32>
    %82 = vector.shape_cast %81 : vector<1x4x4xf32> to vector<4x4xf32>
    %83 = vector.extract_strided_slice %71 {offsets = [0, 2], sizes = [4, 378], strides = [1, 1]} : vector<4x380xf32> to vector<4x378xf32>
    %cst_49 = arith.constant dense<0.000000e+00> : vector<4x378xf32>
    %84 = tpu.matmul %82, %83, %cst_49 {dimension_numbers = #tpu.dot_dimension_numbers<[1], [0], [0], [1], [0, 0, 1, 1], [], []>} : vector<4x4xf32>, vector<4x378xf32>, vector<4x378xf32> -> vector<4x378xf32>
    %85 = arith.addf %80, %84 : vector<4x378xf32>
    %c0_50 = arith.constant 0 : index
    %c0_51 = arith.constant 0 : index
    %86 = vector.load %arg10[%c0_50, %c0_51] : memref<4x1xf32, #tpu.memory_space<vmem>>, vector<4x1xf32>
    %87 = vector.broadcast %86 : vector<4x1xf32> to vector<4x378xf32>
    %88 = arith.addf %85, %87 : vector<4x378xf32>
    %89 = vector.extract_strided_slice %88 {offsets = [0, 125], sizes = [4, 128], strides = [1, 1]} : vector<4x378xf32> to vector<4x128xf32>
    %cst_52 = arith.constant 5.000000e+00 : f32
    %90 = vector.broadcast %cst_52 : f32 to vector<4x128xf32>
    %91 = arith.subf %89, %90 : vector<4x128xf32>
    %92 = arith.negf %91 : vector<4x128xf32>
    %93 = math.exp %92 : vector<4x128xf32>
    %cst_53 = arith.constant 1.000000e+00 : f32
    %94 = vector.broadcast %cst_53 : f32 to vector<4x128xf32>
    %95 = arith.addf %94, %93 : vector<4x128xf32>
    %96 = arith.divf %94, %95 : vector<4x128xf32>
    %c0_54 = arith.constant 0 : index
    %c0_55 = arith.constant 0 : index
    %c0_56 = arith.constant 0 : index
    %97 = vector.load %arg4[%c0_54, %c0_55, %c0_56] : memref<1x4x128xf32, #tpu.memory_space<vmem>>, vector<1x4x128xf32>
    %98 = vector.shape_cast %97 : vector<1x4x128xf32> to vector<4x128xf32>
    %99 = arith.mulf %98, %96 : vector<4x128xf32>
    %cst_57 = arith.constant dense<0.000000e+00> : vector<128xf32>
    %100 = vector.multi_reduction <add>, %99, %cst_57 [0] : vector<4x128xf32> to vector<128xf32>
    %101 = vector.shape_cast %100 : vector<128xf32> to vector<1x128xf32>
    %c0_58 = arith.constant 0 : index
    %c0_59 = arith.constant 0 : index
    %c0_60 = arith.constant 0 : index
    %102 = vector.load %arg11[%c0_58, %c0_59, %c0_60] : memref<1x1x128xf32, #tpu.memory_space<vmem>>, vector<1x1x128xf32>
    %103 = vector.shape_cast %102 : vector<1x1x128xf32> to vector<1x128xf32>
    %104 = vector.shape_cast %101 : vector<1x128xf32> to vector<1x1x128xf32>
    tpu.vector_store %arg11[%c0_58, %c0_59, %c0_60], %104 {strides = array<i32>} : memref<1x1x128xf32, #tpu.memory_space<vmem>>, vector<1x1x128xf32>,
    return
  }
  func.func @transform_0(%arg0: i32, %arg1: i32) -> (i32, i32, i32) {
    %c0_i32 = arith.constant 0 : i32
    %c0_i32_0 = arith.constant 0 : i32
    return %arg0, %c0_i32, %arg1 : i32, i32, i32
  }
  func.func @transform_1(%arg0: i32, %arg1: i32) -> (i32, i32, i32, i32) {
    %c0_i32 = arith.constant 0 : i32
    %c0_i32_0 = arith.constant 0 : i32
    %c0_i32_1 = arith.constant 0 : i32
    return %arg0, %arg1, %c0_i32, %c0_i32_0 : i32, i32, i32, i32
  }
  func.func @transform_2(%arg0: i32, %arg1: i32) -> (i32, i32, i32) {
    %c0_i32 = arith.constant 0 : i32
    %c0_i32_0 = arith.constant 0 : i32
    return %arg0, %c0_i32, %arg1 : i32, i32, i32
  }
  func.func @transform_3(%arg0: i32, %arg1: i32) -> (i32, i32, i32) {
    %c0_i32 = arith.constant 0 : i32
    %c0_i32_0 = arith.constant 0 : i32
    %c0_i32_1 = arith.constant 0 : i32
    %c0_i32_2 = arith.constant 0 : i32
    return %c0_i32, %c0_i32_0, %c0_i32_1 : i32, i32, i32
  }
  func.func @transform_4(%arg0: i32, %arg1: i32) -> (i32, i32) {
    %c0_i32 = arith.constant 0 : i32
    %c0_i32_0 = arith.constant 0 : i32
    %c0_i32_1 = arith.constant 0 : i32
    return %c0_i32, %c0_i32_0 : i32, i32
  }
  func.func @transform_5(%arg0: i32, %arg1: i32) -> (i32, i32, i32) {
    %c0_i32 = arith.constant 0 : i32
    %c0_i32_0 = arith.constant 0 : i32
    %c0_i32_1 = arith.constant 0 : i32
    %c0_i32_2 = arith.constant 0 : i32
    return %c0_i32, %c0_i32_0, %c0_i32_1 : i32, i32, i32
  }
  func.func @transform_6(%arg0: i32, %arg1: i32) -> (i32, i32) {
    %c0_i32 = arith.constant 0 : i32
    %c0_i32_0 = arith.constant 0 : i32
    %c0_i32_1 = arith.constant 0 : i32
    return %c0_i32, %c0_i32_0 : i32, i32
  }
  func.func @transform_7(%arg0: i32, %arg1: i32) -> (i32, i32, i32) {
    %c0_i32 = arith.constant 0 : i32
    %c0_i32_0 = arith.constant 0 : i32
    %c0_i32_1 = arith.constant 0 : i32
    %c0_i32_2 = arith.constant 0 : i32
    return %c0_i32, %c0_i32_0, %c0_i32_1 : i32, i32, i32
  }
  func.func @transform_8(%arg0: i32, %arg1: i32) -> (i32, i32) {
    %c0_i32 = arith.constant 0 : i32
    %c0_i32_0 = arith.constant 0 : i32
    %c0_i32_1 = arith.constant 0 : i32
    return %c0_i32, %c0_i32_0 : i32, i32
  }
  func.func @transform_9(%arg0: i32, %arg1: i32) -> (i32, i32, i32) {
    %c0_i32 = arith.constant 0 : i32
    %c0_i32_0 = arith.constant 0 : i32
    return %arg0, %c0_i32, %arg1 : i32, i32, i32
  }
}

</mosaic_0001>

<llo_original>
// kernel: noise_generator.1
$region0: #{noise_generator.1}
  #allocation0 [shape = 'u32[]', space=smem, size = 0x4, offset = 0x4, fixed_abs, tag = 'smem constant byte address 0x4 - core index']
  #allocation1 [shape = 'u32[144,128]{1,0:T(1,128)}', space=vmem, size = 0x12000, scoped, tag = 'internal scratch']
  %s0 = inlined_call_operand.vmem [shape: f32[2,16,384], index: 0, kind: input, shape index: {}]
  %s1 = inlined_call_operand.vmem [shape: f32[2,3,16,256], index: 1, kind: input, shape index: {}]
  %s2 = inlined_call_operand.vmem [shape: f32[2,4,384], index: 2, kind: input, shape index: {}]
  %s3 = inlined_call_operand.vmem [shape: f32[3,8,16], index: 3, kind: input, shape index: {}]
  %s4 = inlined_call_operand.vmem [shape: f32[8,1], index: 4, kind: input, shape index: {}]
  %s5 = inlined_call_operand.vmem [shape: f32[3,4,8], index: 5, kind: input, shape index: {}]
  %s6 = inlined_call_operand.vmem [shape: f32[4,1], index: 6, kind: input, shape index: {}]
  %s7 = inlined_call_operand.vmem [shape: f32[3,4,4], index: 7, kind: input, shape index: {}]
  %s8 = inlined_call_operand.vmem [shape: f32[4,1], index: 8, kind: input, shape index: {}]
  %s9 = inlined_call_operand.hbm [shape: f32[2,1,384], index: 9, kind: output, shape index: {}]
  %s10 = sld [smem:[#allocation0]]
  $region107: #{noise_generator.1} parent=0
    _
  %s12 = ssub.s32 1, %s10
  %s13 = scalar_select 0, %s12, %s10
  $region1: #{noise_generator.1} parent=0
    #allocation2 [shape = 'u8[16384]{0}', space=vmem, size = 0x4000, scoped, tag = 'input window, operand 0']
    #allocation3 [shape = 'u8[1024]{0}', space=vmem, size = 0x400, scoped, tag = 'output window, operand 0']
    #allocation4 [shape = 's32[2]{0}', space=sflag, size = 0x8, scoped, tag = 'scoped memory for noise_generator.1']
    %14 = vsyncpa [#allocation4], 0
    %s15 = scalar_lea.sflag [#allocation4], 1
    %16 = vsyncpa %s15, 0
    loop: start=0, step=1, limit=8
    $region2: #{noise_generator.1} parent=1 // loop_pre_header
      _
    $region3: #{noise_generator.1} parent=1 // loop_header
      %s18 = sphi 0, %s22
      %p19 = scmp.ge.s32.totalorder %s18, 8
      %s25 = sphi 0, %s37
      %s26 = sphi 0, %s33
      %s27 = sphi 0, %s25
      %s28 = sphi 0, %s26
      %s29 = sphi 0, %s27
      %s30 = sphi 0, %s28
      %s42 = sphi 0, %s44
      %s45 = sphi 0, %s42
      %s46 = sphi 0, %s45
      %s62 = sphi 0, %s46
      %s70 = sphi 0, %s72
      %s73 = sphi 0, %s70
      %s74 = sphi 0, %s73
      %s90 = sphi 0, %s74
      %s98 = sphi 0, %s100
      %s101 = sphi 0, %s98
      %s102 = sphi 0, %s101
      %s118 = sphi 0, %s102
      %s122 = sphi 0, %s122
      %s124 = sphi 0, %s122
      %s125 = sphi 0, %s124
      %s139 = sphi 0, %s125
      %s143 = sphi 0, %s143
      %s145 = sphi 0, %s143
      %s146 = sphi 0, %s145
      %s160 = sphi 0, %s146
      %s164 = sphi 0, %s164
      %s166 = sphi 0, %s164
      %s167 = sphi 0, %s166
      %s181 = sphi 0, %s167
      %s185 = sphi 0, %s185
      %s187 = sphi 0, %s185
      %s188 = sphi 0, %s187
      %s202 = sphi 0, %s188
      %s206 = sphi 0, %s206
      %s208 = sphi 0, %s206
      %s209 = sphi 0, %s208
      %s223 = sphi 0, %s209
      %s227 = sphi 0, %s227
      %s229 = sphi 0, %s227
      %s230 = sphi 0, %s229
      %s244 = sphi 0, %s230
      %s252 = sphi 0, %s254
      %s255 = sphi 0, %s252
      %s256 = sphi 0, %s255
      %s272 = sphi 0, %s256
    $region4: #{noise_generator.1} parent=1 // loop_header_branch
      %21 = sbr.rel (%p19) target = $region8
    $region5: #{noise_generator.1} parent=1 // loop_body
      %s23 = ssub.s32 %s18, 1
      %s24 = ssub.s32 %s18, 2
      %s31 = sadd.s32 1, %s26
      %p32 = scmp.ge.s32.totalorder %s31, 3
      %s33 = scalar_select %p32, 0, %s31
      %s34 = sadd.s32 1, %s25
      %s35 = scalar_select %p32, %s34, %s25
      %p36 = scmp.ge.s32.totalorder %s35, 2
      %s37 = scalar_select %p36, 0, %s35
      %s38 = ssub.s32 %s25, %s37
      %s39 = ssub.s32 %s26, %s33
      %s40 = sor.u32 %s38, %s39
      %p41 = scmp.eq.s32.totalorder %s40, 0
      %s43 = sadd.s32 %s42, 1
      %s44 = scalar_select %p41, %s42, %s43
      %p47 = pneg %p41
      %p48 = scmp.eq.s32.totalorder %s18, 5
      %p49 = por %p47, %p48
      %p50 = scmp.ne.s32.totalorder %s42, %s45
      %p51 = scmp.eq.s32.totalorder %s18, 0
      %p52 = por %p50, %p51
      %p53 = scmp.ne.s32.totalorder %s42, %s45
      %p54 = scmp.eq.s32.totalorder %s23, 5
      %p55 = por %p53, %p54
      %p56 = scmp.ne.s32.totalorder %s45, %s46
      %p57 = scmp.eq.s32.totalorder %s23, 0
      %p58 = por %p56, %p57
      %p59 = scmp.ne.s32.totalorder %s45, %s46
      %p60 = scmp.eq.s32.totalorder %s24, 5
      %p61 = por %p59, %p60
      %p63 = scmp.ne.s32.totalorder %s46, %s62
      %p64 = scmp.eq.s32.totalorder %s24, 0
      %p65 = por %p63, %p64
      %s66 = ssub.s32 %s25, %s37
      %s67 = ssub.s32 %s26, %s33
      %s68 = sor.u32 %s66, %s67
      %p69 = scmp.eq.s32.totalorder %s68, 0
      %s71 = sadd.s32 %s70, 1
      %s72 = scalar_select %p69, %s70, %s71
      %p75 = pneg %p69
      %p76 = scmp.eq.s32.totalorder %s18, 5
      %p77 = por %p75, %p76
      %p78 = scmp.ne.s32.totalorder %s70, %s73
      %p79 = scmp.eq.s32.totalorder %s18, 0
      %p80 = por %p78, %p79
      %p81 = scmp.ne.s32.totalorder %s70, %s73
      %p82 = scmp.eq.s32.totalorder %s23, 5
      %p83 = por %p81, %p82
      %p84 = scmp.ne.s32.totalorder %s73, %s74
      %p85 = scmp.eq.s32.totalorder %s23, 0
      %p86 = por %p84, %p85
      %p87 = scmp.ne.s32.totalorder %s73, %s74
      %p88 = scmp.eq.s32.totalorder %s24, 5
      %p89 = por %p87, %p88
      %p91 = scmp.ne.s32.totalorder %s74, %s90
      %p92 = scmp.eq.s32.totalorder %s24, 0
      %p93 = por %p91, %p92
      %s94 = ssub.s32 %s25, %s37
      %s95 = ssub.s32 %s26, %s33
      %s96 = sor.u32 %s94, %s95
      %p97 = scmp.eq.s32.totalorder %s96, 0
      %s99 = sadd.s32 %s98, 1
      %s100 = scalar_select %p97, %s98, %s99
      %p103 = pneg %p97
      %p104 = scmp.eq.s32.totalorder %s18, 5
      %p105 = por %p103, %p104
      %p106 = scmp.ne.s32.totalorder %s98, %s101
      %p107 = scmp.eq.s32.totalorder %s18, 0
      %p108 = por %p106, %p107
      %p109 = scmp.ne.s32.totalorder %s98, %s101
      %p110 = scmp.eq.s32.totalorder %s23, 5
      %p111 = por %p109, %p110
      %p112 = scmp.ne.s32.totalorder %s101, %s102
      %p113 = scmp.eq.s32.totalorder %s23, 0
      %p114 = por %p112, %p113
      %p115 = scmp.ne.s32.totalorder %s101, %s102
      %p116 = scmp.eq.s32.totalorder %s24, 5
      %p117 = por %p115, %p116
      %p119 = scmp.ne.s32.totalorder %s102, %s118
      %p120 = scmp.eq.s32.totalorder %s24, 0
      %p121 = por %p119, %p120
      %s123 = sadd.s32 %s122, 1
      %p126 = scmp.eq.s32.totalorder %s18, 5
      %p127 = scmp.ne.s32.totalorder %s122, %s124
      %p128 = scmp.eq.s32.totalorder %s18, 0
      %p129 = por %p127, %p128
      %p130 = scmp.ne.s32.totalorder %s122, %s124
      %p131 = scmp.eq.s32.totalorder %s23, 5
      %p132 = por %p130, %p131
      %p133 = scmp.ne.s32.totalorder %s124, %s125
      %p134 = scmp.eq.s32.totalorder %s23, 0
      %p135 = por %p133, %p134
      %p136 = scmp.ne.s32.totalorder %s124, %s125
      %p137 = scmp.eq.s32.totalorder %s24, 5
      %p138 = por %p136, %p137
      %p140 = scmp.ne.s32.totalorder %s125, %s139
      %p141 = scmp.eq.s32.totalorder %s24, 0
      %p142 = por %p140, %p141
      %s144 = sadd.s32 %s143, 1
      %p147 = scmp.eq.s32.totalorder %s18, 5
      %p148 = scmp.ne.s32.totalorder %s143, %s145
      %p149 = scmp.eq.s32.totalorder %s18, 0
      %p150 = por %p148, %p149
      %p151 = scmp.ne.s32.totalorder %s143, %s145
      %p152 = scmp.eq.s32.totalorder %s23, 5
      %p153 = por %p151, %p152
      %p154 = scmp.ne.s32.totalorder %s145, %s146
      %p155 = scmp.eq.s32.totalorder %s23, 0
      %p156 = por %p154, %p155
      %p157 = scmp.ne.s32.totalorder %s145, %s146
      %p158 = scmp.eq.s32.totalorder %s24, 5
      %p159 = por %p157, %p158
      %p161 = scmp.ne.s32.totalorder %s146, %s160
      %p162 = scmp.eq.s32.totalorder %s24, 0
      %p163 = por %p161, %p162
      %s165 = sadd.s32 %s164, 1
      %p168 = scmp.eq.s32.totalorder %s18, 5
      %p169 = scmp.ne.s32.totalorder %s164, %s166
      %p170 = scmp.eq.s32.totalorder %s18, 0
      %p171 = por %p169, %p170
      %p172 = scmp.ne.s32.totalorder %s164, %s166
      %p173 = scmp.eq.s32.totalorder %s23, 5
      %p174 = por %p172, %p173
      %p175 = scmp.ne.s32.totalorder %s166, %s167
      %p176 = scmp.eq.s32.totalorder %s23, 0
      %p177 = por %p175, %p176
      %p178 = scmp.ne.s32.totalorder %s166, %s167
      %p179 = scmp.eq.s32.totalorder %s24, 5
      %p180 = por %p178, %p179
      %p182 = scmp.ne.s32.totalorder %s167, %s181
      %p183 = scmp.eq.s32.totalorder %s24, 0
      %p184 = por %p182, %p183
      %s186 = sadd.s32 %s185, 1
      %p189 = scmp.eq.s32.totalorder %s18, 5
      %p190 = scmp.ne.s32.totalorder %s185, %s187
      %p191 = scmp.eq.s32.totalorder %s18, 0
      %p192 = por %p190, %p191
      %p193 = scmp.ne.s32.totalorder %s185, %s187
      %p194 = scmp.eq.s32.totalorder %s23, 5
      %p195 = por %p193, %p194
      %p196 = scmp.ne.s32.totalorder %s187, %s188
      %p197 = scmp.eq.s32.totalorder %s23, 0
      %p198 = por %p196, %p197
      %p199 = scmp.ne.s32.totalorder %s187, %s188
      %p200 = scmp.eq.s32.totalorder %s24, 5
      %p201 = por %p199, %p200
      %p203 = scmp.ne.s32.totalorder %s188, %s202
      %p204 = scmp.eq.s32.totalorder %s24, 0
      %p205 = por %p203, %p204
      %s207 = sadd.s32 %s206, 1
      %p210 = scmp.eq.s32.totalorder %s18, 5
      %p211 = scmp.ne.s32.totalorder %s206, %s208
      %p212 = scmp.eq.s32.totalorder %s18, 0
      %p213 = por %p211, %p212
      %p214 = scmp.ne.s32.totalorder %s206, %s208
      %p215 = scmp.eq.s32.totalorder %s23, 5
      %p216 = por %p214, %p215
      %p217 = scmp.ne.s32.totalorder %s208, %s209
      %p218 = scmp.eq.s32.totalorder %s23, 0
      %p219 = por %p217, %p218
      %p220 = scmp.ne.s32.totalorder %s208, %s209
      %p221 = scmp.eq.s32.totalorder %s24, 5
      %p222 = por %p220, %p221
      %p224 = scmp.ne.s32.totalorder %s209, %s223
      %p225 = scmp.eq.s32.totalorder %s24, 0
      %p226 = por %p224, %p225
      %s228 = sadd.s32 %s227, 1
      %p231 = scmp.eq.s32.totalorder %s18, 5
      %p232 = scmp.ne.s32.totalorder %s227, %s229
      %p233 = scmp.eq.s32.totalorder %s18, 0
      %p234 = por %p232, %p233
      %p235 = scmp.ne.s32.totalorder %s227, %s229
      %p236 = scmp.eq.s32.totalorder %s23, 5
      %p237 = por %p235, %p236
      %p238 = scmp.ne.s32.totalorder %s229, %s230
      %p239 = scmp.eq.s32.totalorder %s23, 0
      %p240 = por %p238, %p239
      %p241 = scmp.ne.s32.totalorder %s229, %s230
      %p242 = scmp.eq.s32.totalorder %s24, 5
      %p243 = por %p241, %p242
      %p245 = scmp.ne.s32.totalorder %s230, %s244
      %p246 = scmp.eq.s32.totalorder %s24, 0
      %p247 = por %p245, %p246
      %s248 = ssub.s32 %s25, %s37
      %s249 = ssub.s32 %s26, %s33
      %s250 = sor.u32 %s248, %s249
      %p251 = scmp.eq.s32.totalorder %s250, 0
      %s253 = sadd.s32 %s252, 1
      %s254 = scalar_select %p251, %s252, %s253
      %p257 = pneg %p251
      %p258 = scmp.eq.s32.totalorder %s18, 5
      %p259 = por %p257, %p258
      %p260 = scmp.ne.s32.totalorder %s252, %s255
      %p261 = scmp.eq.s32.totalorder %s18, 0
      %p262 = por %p260, %p261
      %p263 = scmp.ne.s32.totalorder %s252, %s255
      %p264 = scmp.eq.s32.totalorder %s23, 5
      %p265 = por %p263, %p264
      %p266 = scmp.ne.s32.totalorder %s255, %s256
      %p267 = scmp.eq.s32.totalorder %s23, 0
      %p268 = por %p266, %p267
      %p269 = scmp.ne.s32.totalorder %s255, %s256
      %p270 = scmp.eq.s32.totalorder %s24, 5
      %p271 = por %p269, %p270
      %p273 = scmp.ne.s32.totalorder %s256, %s272
      %p274 = scmp.eq.s32.totalorder %s24, 0
      %p275 = por %p273, %p274
      %p276 = scmp.le.s32.totalorder 1, %s18
      %p277 = scmp.lt.s32.totalorder %s18, 7
      %p278 = pnand %p276, %p277
      %p279 = pneg %p278
      // Predicated region
      $region9: #{noise_generator.1} parent=5 // pred_check
        _
      $region10: #{noise_generator.1} parent=5 // pred_check_branch
        %281 = sbr.rel (%p278) target = $region12
      $region11: #{noise_generator.1} parent=5 // pred_region
        %s282 = ssub.s32 %s18, 1
        // Predicated region
        $region13: #{noise_generator.1} parent=11 // pred_check
          %p283 = pneg %p135
        $region14: #{noise_generator.1} parent=11 // pred_check_branch
          %285 = sbr.rel (%p283) target = $region16
        $region15: #{noise_generator.1} parent=11 // pred_region
          _
        $region16: #{noise_generator.1} parent=11 // pred_fallthru
          _
        // Predicated region
        $region17: #{noise_generator.1} parent=11 // pred_check
          %p286 = pneg %p156
        $region18: #{noise_generator.1} parent=11 // pred_check_branch
          %288 = sbr.rel (%p286) target = $region20
        $region19: #{noise_generator.1} parent=11 // pred_region
          _
        $region20: #{noise_generator.1} parent=11 // pred_fallthru
          _
        // Predicated region
        $region21: #{noise_generator.1} parent=11 // pred_check
          %p289 = pneg %p177
        $region22: #{noise_generator.1} parent=11 // pred_check_branch
          %291 = sbr.rel (%p289) target = $region24
        $region23: #{noise_generator.1} parent=11 // pred_region
          _
        $region24: #{noise_generator.1} parent=11 // pred_fallthru
          _
        // Predicated region
        $region25: #{noise_generator.1} parent=11 // pred_check
          %p292 = pneg %p198
        $region26: #{noise_generator.1} parent=11 // pred_check_branch
          %294 = sbr.rel (%p292) target = $region28
        $region27: #{noise_generator.1} parent=11 // pred_region
          _
        $region28: #{noise_generator.1} parent=11 // pred_fallthru
          _
        // Predicated region
        $region29: #{noise_generator.1} parent=11 // pred_check
          %p295 = pneg %p219
        $region30: #{noise_generator.1} parent=11 // pred_check_branch
          %297 = sbr.rel (%p295) target = $region32
        $region31: #{noise_generator.1} parent=11 // pred_region
          _
        $region32: #{noise_generator.1} parent=11 // pred_fallthru
          _
        // Predicated region
        $region33: #{noise_generator.1} parent=11 // pred_check
          %p298 = pneg %p240
        $region34: #{noise_generator.1} parent=11 // pred_check_branch
          %300 = sbr.rel (%p298) target = $region36
        $region35: #{noise_generator.1} parent=11 // pred_region
          _
        $region36: #{noise_generator.1} parent=11 // pred_fallthru
          _
      $region12: #{noise_generator.1} parent=5 // pred_fallthru
        _
      %p301 = scmp.lt.s32.totalorder %s18, 6
      // Predicated region
      $region37: #{noise_generator.1} parent=5 // pred_check
        %p302 = pneg %p301
      $region38: #{noise_generator.1} parent=5 // pred_check_branch
        %304 = sbr.rel (%p302) target = $region40
      $region39: #{noise_generator.1} parent=5 // pred_region
        // Predicated region
        $region41: #{noise_generator.1} parent=39 // pred_check
          %p305 = pneg %p52
        $region42: #{noise_generator.1} parent=39 // pred_check_branch
          %307 = sbr.rel (%p305) target = $region44
        $region43: #{noise_generator.1} parent=39 // pred_region
          %s308 = sand.u32 %s42, 1
          %s309 = sand.u32 %s42, 1
          %s310 = smul.addr %s309, 16
          %s311 = scalar_lea.vmem [#allocation2], %s310
          %s312 = smul.addr %s25, 6
          %s313 = sadd.s32 %s26, %s312
          %s314 = smul.addr %s313, 8
          %s315 = scalar_lea.vmem %s0, %s314
          // Predicated region
          $region45: #{noise_generator.1} parent=43 // pred_check
            _
          $region46: #{noise_generator.1} parent=43 // pred_check_branch
            %317 = sbr.rel (0) target = $region48
          $region47: #{noise_generator.1} parent=43 // pred_region
            // Predicated region
            $region49: #{noise_generator.1} parent=47 // pred_check
              _
            $region50: #{noise_generator.1} parent=47 // pred_check_branch
              %319 = sbr.rel (0) target = $region52
            $region51: #{noise_generator.1} parent=47 // pred_region
              // Predicated region
              $region64: #{noise_generator.1} parent=51 // pred_check
                _
              $region65: #{noise_generator.1} parent=51 // pred_check_branch
                %337 = sbr.rel (0) target = $region67
              $region66: #{noise_generator.1} parent=51 // pred_region
                loop: start=0, step=1, limit=1
                $region68: #{noise_generator.1} parent=66 // loop_pre_header
                  _
                $region69: #{noise_generator.1} parent=66 // loop_header
                  %s339 = sphi 0, %s343
                  %p340 = scmp.ge.s32.totalorder %s339, 1
                  %s344 = sphi %s315, %s315
                  %s345 = sphi %s311, %s311
                $region70: #{noise_generator.1} parent=66 // loop_header_branch
                  %342 = sbr.rel (%p340) target = $region74
                $region71: #{noise_generator.1} parent=66 // loop_body
                  %v346 = vld [vmem:[%s344] sm:$0xff]
                  %347 = vst [vmem:[%s345] sm:$0xff] %v346
                  %v348 = vld [vmem:[%s344 + $0x18] sm:$0xff]
                  %349 = vst [vmem:[%s345 + $0x8] sm:$0xff] %v348
                $region72: #{noise_generator.1} parent=66 // loop_footer
                  %s343 = sadd.s32 1, %s339
                $region73: #{noise_generator.1} parent=66 // loop_footer_branch
                  %338 = sbr.rel target = $region69
                $region74: #{noise_generator.1} parent=66 // loop_exit
                  _
              $region67: #{noise_generator.1} parent=51 // pred_fallthru
                _
              // Predicated region
              $region75: #{noise_generator.1} parent=51 // pred_check
                _
              $region76: #{noise_generator.1} parent=51 // pred_check_branch
                %351 = sbr.rel target = $region78
              $region77: #{noise_generator.1} parent=51 // pred_region
                _
              $region78: #{noise_generator.1} parent=51 // pred_fallthru
                _
            $region52: #{noise_generator.1} parent=47 // pred_fallthru
              _
            // Predicated region
            $region53: #{noise_generator.1} parent=47 // pred_check
              _
            $region54: #{noise_generator.1} parent=47 // pred_check_branch
              %321 = sbr.rel target = $region56
            $region55: #{noise_generator.1} parent=47 // pred_region
              %s323 = ssub.s32 256, 1
              loop: start=0, step=1, limit=1
              $region57: #{noise_generator.1} parent=55 // loop_pre_header
                _
              $region58: #{noise_generator.1} parent=55 // loop_header
                %s325 = sphi 0, %s329
                %p326 = scmp.ge.s32.totalorder %s325, 1
                %s330 = sphi %s315, %s315
                %s331 = sphi %s311, %s311
              $region59: #{noise_generator.1} parent=55 // loop_header_branch
                %328 = sbr.rel (%p326) target = $region63
              $region60: #{noise_generator.1} parent=55 // loop_body
                %v332 = vld [vmem:[%s330] sm:%s323]
                %333 = vst [vmem:[%s331] sm:%s323] %v332
                %v334 = vld [vmem:[%s330 + $0x18] sm:%s323]
                %335 = vst [vmem:[%s331 + $0x8] sm:%s323] %v334
              $region61: #{noise_generator.1} parent=55 // loop_footer
                %s329 = sadd.s32 1, %s325
              $region62: #{noise_generator.1} parent=55 // loop_footer_branch
                %324 = sbr.rel target = $region58
              $region63: #{noise_generator.1} parent=55 // loop_exit
                _
            $region56: #{noise_generator.1} parent=47 // pred_fallthru
              _
          $region48: #{noise_generator.1} parent=43 // pred_fallthru
            _
          %352 = vnop
        $region44: #{noise_generator.1} parent=39 // pred_fallthru
          _
        // Predicated region
        $region79: #{noise_generator.1} parent=39 // pred_check
          %p353 = pneg %p80
        $region80: #{noise_generator.1} parent=39 // pred_check_branch
          %355 = sbr.rel (%p353) target = $region82
        $region81: #{noise_generator.1} parent=39 // pred_region
          %p356 = scmp.lt.s32.totalorder %s25, 1
          %s357 = scalar_select %p356, %s25, 1
          %p358 = scmp.lt.s32.totalorder %s26, 2
          %s359 = scalar_select %p358, %s26, 2
          %s360 = smul.addr %s359, 4
          %s361 = smul.addr %s357, 12
          %s362 = sadd.s32 %s360, %s361
          %s363 = smul.addr %s362, 8
          %s364 = scalar_lea.vmem %s1, %s363
        $region82: #{noise_generator.1} parent=39 // pred_fallthru
          _
        // Predicated region
        $region83: #{noise_generator.1} parent=39 // pred_check
          %p365 = pneg %p108
        $region84: #{noise_generator.1} parent=39 // pred_check_branch
          %367 = sbr.rel (%p365) target = $region86
        $region85: #{noise_generator.1} parent=39 // pred_region
          %p368 = scmp.lt.s32.totalorder %s25, 1
          %s369 = scalar_select %p368, %s25, 1
          %p370 = scmp.lt.s32.totalorder %s26, 2
          %s371 = scalar_select %p370, %s26, 2
          %s372 = smul.addr %s369, 3
          %s373 = sadd.s32 %s371, %s372
          %s374 = smul.addr %s373, 4
          %s375 = scalar_lea.vmem %s2, %s374
        $region86: #{noise_generator.1} parent=39 // pred_fallthru
          _
      $region40: #{noise_generator.1} parent=5 // pred_fallthru
        _
      %p376 = scmp.le.s32.totalorder 1, %s18
      %p377 = scmp.lt.s32.totalorder %s18, 7
      %p378 = pnand %p376, %p377
      %p379 = pneg %p378
      // Predicated region
      $region87: #{noise_generator.1} parent=5 // pred_check
        _
      $region88: #{noise_generator.1} parent=5 // pred_check_branch
        %381 = sbr.rel (%p378) target = $region90
      $region89: #{noise_generator.1} parent=5 // pred_region
        %s382 = ssub.s32 %s18, 1
        %s383 = sand.u32 %s45, 1
        %s384 = sand.u32 %s45, 1
        %s385 = smul.addr %s384, 16
        %s386 = scalar_lea.vmem [#allocation2], %s385
        // Predicated region
        $region91: #{noise_generator.1} parent=89 // pred_check
          %p387 = pneg %p58
        $region92: #{noise_generator.1} parent=89 // pred_check_branch
          %389 = sbr.rel (%p387) target = $region94
        $region93: #{noise_generator.1} parent=89 // pred_region
          _
        $region94: #{noise_generator.1} parent=89 // pred_fallthru
          _
        %s390 = sand.u32 %s45, 1
        %s391 = sand.u32 %s45, 1
        %s392 = smul.addr %s391, 16
        %s393 = scalar_lea.vmem [#allocation2], %s392
        %p394 = pneg %p58
        %p395 = pneg %p55
        %p396 = scmp.lt.s32.totalorder %s27, 1
        %s397 = scalar_select %p396, %s27, 1
        %p398 = scmp.lt.s32.totalorder %s28, 2
        %s399 = scalar_select %p398, %s28, 2
        %s400 = smul.addr %s399, 4
        %s401 = smul.addr %s397, 12
        %s402 = sadd.s32 %s400, %s401
        %s403 = smul.addr %s402, 8
        %s404 = scalar_lea.vmem %s1, %s403
        %p405 = pneg %p86
        %p406 = pneg %p83
        %p407 = scmp.lt.s32.totalorder %s27, 1
        %s408 = scalar_select %p407, %s27, 1
        %p409 = scmp.lt.s32.totalorder %s28, 2
        %s410 = scalar_select %p409, %s28, 2
        %s411 = smul.addr %s408, 3
        %s412 = sadd.s32 %s410, %s411
        %s413 = smul.addr %s412, 4
        %s414 = scalar_lea.vmem %s2, %s413
        %p415 = pneg %p114
        %p416 = pneg %p111
        %p417 = pneg %p135
        %p418 = pneg %p132
        %p419 = pneg %p156
        %p420 = pneg %p153
        %p421 = pneg %p177
        %p422 = pneg %p174
        %p423 = pneg %p198
        %p424 = pneg %p195
        %p425 = pneg %p219
        %p426 = pneg %p216
        %p427 = pneg %p240
        %p428 = pneg %p237
        %p429 = pneg %p268
        %p430 = pneg %p265
        %s431 = sand.u32 %s255, 1
        %s432 = scalar_lea.sflag [#allocation4], %s431
        %s433 = sand.u32 %s255, 1
        %s434 = scalar_lea.vmem [#allocation3], %s433
        %p435 = scmp.lt.s32.totalorder %s27, 1
        %s436 = scalar_select %p435, %s27, 1
        %p437 = scmp.lt.s32.totalorder %s28, 2
        %s438 = scalar_select %p437, %s28, 2
        %s439 = smul.addr %s438, 4
        %s440 = smul.addr %s436, 12
        %s441 = sadd.s32 %s439, %s440
        %s442 = smul.addr %s441, 8
        %s443 = scalar_lea.vmem %s1, %s442
        %p444 = scmp.lt.s32.totalorder %s27, 1
        %s445 = scalar_select %p444, %s27, 1
        %p446 = scmp.lt.s32.totalorder %s28, 2
        %s447 = scalar_select %p446, %s28, 2
        %s448 = smul.addr %s445, 3
        %s449 = sadd.s32 %s447, %s448
        %s450 = smul.addr %s449, 4
        %s451 = scalar_lea.vmem %s2, %s450
        %v452 = vld [vmem:[%s443] sm:$0xff]
        %v453 = vld [vmem:[%s443 + $0x8] sm:$0xff]
        %v454 = vld [vmem:[%s443 + $0x10] sm:$0xff]
        %v455 = vld [vmem:[%s443 + $0x18] sm:$0xff]
        %v456 = vld [vmem:[%s386] sm:$0xff]
        %v457 = vld [vmem:[%s386 + $0x8] sm:$0xff]
        %s458 = smul.u32 %s28, 128
        %s459 = ssub.s32 %s458, 128
        %v460 = vlaneseq
        %v461 = vand.u32 %v460, 127
        %v462 = vadd.s32 %v461, 128
        %v463 = vadd.s32 %v461, 256
        %v464 = vstv %s459
        %v465 = vadd.s32 %v464, %v461
        %v466 = vadd.s32 %v464, %v462
        %v467 = vadd.s32 %v464, %v463
        %v468 = vld [vmem:[%s3] sm:$0xff]
        %s469 = scalar_lea.vmem %s3, 8
        %v470 = vld [vmem:[%s469] sm:$0xff]
        %477 = vrot.lane.b32.xlu0 %v452, 127
        %v478 = vpop.permute.xlu0 %477
        %479 = vrot.lane.b32.xlu0 %v456, 127
        %v480 = vpop.permute.xlu0 %479
        %481 = vrot.lane.b32.xlu0 %v453, 127
        %v482 = vpop.permute.xlu0 %481
        %483 = vrot.lane.b32.xlu0 %v454, 127
        %v484 = vpop.permute.xlu0 %483
        %485 = vrot.lane.b32.xlu0 %v457, 127
        %v486 = vpop.permute.xlu0 %485
        %487 = vrot.lane.b32.xlu0 %v455, 127
        %v488 = vpop.permute.xlu0 %487
        %vm489 = vcmask 1039360
        %v490 = vsel %vm489, %v478, %v480
        %v491 = vsel %vm489, %v480, %v482
        %v492 = vsel %vm489, %v484, %v486
        %v493 = vsel %vm489, %v486, %v488
        %vm500 = vcmask 130048
        %v502 = vsel %vm500, %v470, 0
        %504 = vmatprep.subr.mxu0 0.0
        %505 = vmatpush1.msra.mxu0 0.0
        %506 = vmatprep.subr.mxu0 0.0
        %507 = vmatpush1.msra.mxu0 0.0
        %508 = vmatprep.subr.mxu0 0.0
        %509 = vmatpush1.msra.mxu0 0.0
        %510 = vmatprep.subr.mxu0 0.0
        %511 = vmatpush1.msra.mxu0 0.0
        %512 = vmatprep.subr.mxu0 0.0
        %513 = vmatpush1.msra.mxu0 0.0
        %514 = vmatprep.subr.mxu0 0.0
        %515 = vmatpush1.msra.mxu0 0.0
        %516 = vmatprep.subr.mxu0 0.0
        %517 = vmatpush1.msra.mxu0 0.0
        %518 = vmatprep.subr.mxu0 0.0
        %519 = vmatpush1.msra.mxu0 0.0
        %520 = vmatprep.subr.mxu0 0.0
        %521 = vmatpush1.msra.mxu0 0.0
        %522 = vmatprep.subr.mxu0 0.0
        %523 = vmatpush1.msra.mxu0 0.0
        %524 = vmatprep.subr.mxu0 0.0
        %525 = vmatpush1.msra.mxu0 0.0
        %526 = vmatprep.subr.mxu0 0.0
        %527 = vmatpush1.msra.mxu0 0.0
        %528 = vmatprep.subr.mxu0 0.0
        %529 = vmatpush1.msra.mxu0 0.0
        %530 = vmatprep.subr.mxu0 0.0
        %531 = vmatpush1.msra.mxu0 0.0
        %532 = vmatprep.subr.mxu0 %v493
        %533 = vmatpush1.msra.mxu0 %v492
        %534 = vmatprep.subr.mxu0 %v491
        %535 = vmatpush1.msra.mxu0 %v490
        %536 = vmatprep.subr.mxu0 0.0
        %537 = vmatpush2.msra.mxu0 0.0
        %538 = vmatprep.subr.mxu0 0.0
        %539 = vmatpush2.msra.mxu0 0.0
        %540 = vmatprep.subr.mxu0 0.0
        %541 = vmatpush2.msra.mxu0 0.0
        %542 = vmatprep.subr.mxu0 0.0
        %543 = vmatpush2.msra.mxu0 0.0
        %544 = vmatprep.subr.mxu0 0.0
        %545 = vmatpush2.msra.mxu0 0.0
        %546 = vmatprep.subr.mxu0 0.0
        %547 = vmatpush2.msra.mxu0 0.0
        %548 = vmatprep.subr.mxu0 0.0
        %549 = vmatpush2.msra.mxu0 0.0
        %550 = vmatprep.subr.mxu0 0.0
        %551 = vmatpush2.msra.mxu0 0.0
        %552 = vmatprep.subr.mxu0 0.0
        %553 = vmatpush2.msra.mxu0 0.0
        %554 = vmatprep.subr.mxu0 0.0
        %555 = vmatpush2.msra.mxu0 0.0
        %556 = vmatprep.subr.mxu0 0.0
        %557 = vmatpush2.msra.mxu0 0.0
        %558 = vmatprep.subr.mxu0 0.0
        %559 = vmatpush2.msra.mxu0 0.0
        %560 = vmatprep.subr.mxu0 0.0
        %561 = vmatpush2.msra.mxu0 0.0
        %562 = vmatprep.subr.mxu0 0.0
        %563 = vmatpush2.msra.mxu0 0.0
        %564 = vmatprep.subr.mxu0 0.0
        %565 = vmatpush2.msra.mxu0 0.0
        %566 = vmatprep.subr.mxu0 0.0
        %567 = vmatpush2.msra.mxu0 0.0
        %568 = vmatprep.mubr.f32.mxu0 0.0
        %569 = vmatmul.mubr.f32.gmra.mxu0 %v502
        %v570 = vpop.f32.mrf.mxu0
        %v571 = vadd.f32 0.0, %v570
        %v572 = vpop.f32.mrf.mxu0
        %v573 = vadd.f32 0.0, %v572
        %574 = vdwg.mxu0
        %575 = vmatprep.subr.mxu0 0.0
        %576 = vmatpush1.msra.mxu0 0.0
        %577 = vmatprep.subr.mxu0 0.0
        %578 = vmatpush1.msra.mxu0 0.0
        %579 = vmatprep.subr.mxu0 0.0
        %580 = vmatpush1.msra.mxu0 0.0
        %581 = vmatprep.subr.mxu0 0.0
        %582 = vmatpush1.msra.mxu0 0.0
        %583 = vmatprep.subr.mxu0 0.0
        %584 = vmatpush1.msra.mxu0 0.0
        %585 = vmatprep.subr.mxu0 0.0
        %586 = vmatpush1.msra.mxu0 0.0
        %587 = vmatprep.subr.mxu0 0.0
        %588 = vmatpush1.msra.mxu0 0.0
        %589 = vmatprep.subr.mxu0 0.0
        %590 = vmatpush1.msra.mxu0 0.0
        %591 = vmatprep.subr.mxu0 0.0
        %592 = vmatpush1.msra.mxu0 0.0
        %593 = vmatprep.subr.mxu0 0.0
        %594 = vmatpush1.msra.mxu0 0.0
        %595 = vmatprep.subr.mxu0 0.0
        %596 = vmatpush1.msra.mxu0 0.0
        %597 = vmatprep.subr.mxu0 0.0
        %598 = vmatpush1.msra.mxu0 0.0
        %599 = vmatprep.subr.mxu0 0.0
        %600 = vmatpush1.msra.mxu0 0.0
        %601 = vmatprep.subr.mxu0 0.0
        %602 = vmatpush1.msra.mxu0 0.0
        %603 = vmatprep.subr.mxu0 0.0
        %604 = vmatpush1.msra.mxu0 %v488
        %605 = vmatprep.subr.mxu0 0.0
        %606 = vmatpush1.msra.mxu0 %v482
        %607 = vmatprep.subr.mxu0 0.0
        %608 = vmatpush2.msra.mxu0 0.0
        %609 = vmatprep.subr.mxu0 0.0
        %610 = vmatpush2.msra.mxu0 0.0
        %611 = vmatprep.subr.mxu0 0.0
        %612 = vmatpush2.msra.mxu0 0.0
        %613 = vmatprep.subr.mxu0 0.0
        %614 = vmatpush2.msra.mxu0 0.0
        %615 = vmatprep.subr.mxu0 0.0
        %616 = vmatpush2.msra.mxu0 0.0
        %617 = vmatprep.subr.mxu0 0.0
        %618 = vmatpush2.msra.mxu0 0.0
        %619 = vmatprep.subr.mxu0 0.0
        %620 = vmatpush2.msra.mxu0 0.0
        %621 = vmatprep.subr.mxu0 0.0
        %622 = vmatpush2.msra.mxu0 0.0
        %623 = vmatprep.subr.mxu0 0.0
        %624 = vmatpush2.msra.mxu0 0.0
        %625 = vmatprep.subr.mxu0 0.0
        %626 = vmatpush2.msra.mxu0 0.0
        %627 = vmatprep.subr.mxu0 0.0
        %628 = vmatpush2.msra.mxu0 0.0
        %629 = vmatprep.subr.mxu0 0.0
        %630 = vmatpush2.msra.mxu0 0.0
        %631 = vmatprep.subr.mxu0 0.0
        %632 = vmatpush2.msra.mxu0 0.0
        %633 = vmatprep.subr.mxu0 0.0
        %634 = vmatpush2.msra.mxu0 0.0
        %635 = vmatprep.subr.mxu0 0.0
        %636 = vmatpush2.msra.mxu0 0.0
        %637 = vmatprep.subr.mxu0 0.0
        %638 = vmatpush2.msra.mxu0 0.0
        %639 = vmatprep.mubr.f32.mxu0 0.0
        %640 = vmatmul.mubr.f32.gmra.mxu0 %v502
        %v641 = vpop.f32.mrf.mxu0
        %v642 = vadd.f32 0.0, %v641
        %v643 = vpop.f32.mrf.mxu0
        %644 = vdwg.mxu0
        %v646 = vsel %vm500, %v468, 0
        %648 = vmatprep.subr.mxu0 0.0
        %649 = vmatpush1.msra.mxu0 0.0
        %650 = vmatprep.subr.mxu0 0.0
        %651 = vmatpush1.msra.mxu0 0.0
        %652 = vmatprep.subr.mxu0 0.0
        %653 = vmatpush1.msra.mxu0 0.0
        %654 = vmatprep.subr.mxu0 0.0
        %655 = vmatpush1.msra.mxu0 0.0
        %656 = vmatprep.subr.mxu0 0.0
        %657 = vmatpush1.msra.mxu0 0.0
        %658 = vmatprep.subr.mxu0 0.0
        %659 = vmatpush1.msra.mxu0 0.0
        %660 = vmatprep.subr.mxu0 0.0
        %661 = vmatpush1.msra.mxu0 0.0
        %662 = vmatprep.subr.mxu0 0.0
        %663 = vmatpush1.msra.mxu0 0.0
        %664 = vmatprep.subr.mxu0 0.0
        %665 = vmatpush1.msra.mxu0 0.0
        %666 = vmatprep.subr.mxu0 0.0
        %667 = vmatpush1.msra.mxu0 0.0
        %668 = vmatprep.subr.mxu0 0.0
        %669 = vmatpush1.msra.mxu0 0.0
        %670 = vmatprep.subr.mxu0 0.0
        %671 = vmatpush1.msra.mxu0 0.0
        %672 = vmatprep.subr.mxu0 0.0
        %673 = vmatpush1.msra.mxu0 0.0
        %674 = vmatprep.subr.mxu0 0.0
        %675 = vmatpush1.msra.mxu0 0.0
        %676 = vmatprep.subr.mxu0 %v457
        %677 = vmatpush1.msra.mxu0 %v454
        %678 = vmatprep.subr.mxu0 %v456
        %679 = vmatpush1.msra.mxu0 %v452
        %680 = vmatprep.subr.mxu0 0.0
        %681 = vmatpush2.msra.mxu0 0.0
        %682 = vmatprep.subr.mxu0 0.0
        %683 = vmatpush2.msra.mxu0 0.0
        %684 = vmatprep.subr.mxu0 0.0
        %685 = vmatpush2.msra.mxu0 0.0
        %686 = vmatprep.subr.mxu0 0.0
        %687 = vmatpush2.msra.mxu0 0.0
        %688 = vmatprep.subr.mxu0 0.0
        %689 = vmatpush2.msra.mxu0 0.0
        %690 = vmatprep.subr.mxu0 0.0
        %691 = vmatpush2.msra.mxu0 0.0
        %692 = vmatprep.subr.mxu0 0.0
        %693 = vmatpush2.msra.mxu0 0.0
        %694 = vmatprep.subr.mxu0 0.0
        %695 = vmatpush2.msra.mxu0 0.0
        %696 = vmatprep.subr.mxu0 0.0
        %697 = vmatpush2.msra.mxu0 0.0
        %698 = vmatprep.subr.mxu0 0.0
        %699 = vmatpush2.msra.mxu0 0.0
        %700 = vmatprep.subr.mxu0 0.0
        %701 = vmatpush2.msra.mxu0 0.0
        %702 = vmatprep.subr.mxu0 0.0
        %703 = vmatpush2.msra.mxu0 0.0
        %704 = vmatprep.subr.mxu0 0.0
        %705 = vmatpush2.msra.mxu0 0.0
        %706 = vmatprep.subr.mxu0 0.0
        %707 = vmatpush2.msra.mxu0 0.0
        %708 = vmatprep.subr.mxu0 0.0
        %709 = vmatpush2.msra.mxu0 0.0
        %710 = vmatprep.subr.mxu0 0.0
        %711 = vmatpush2.msra.mxu0 0.0
        %712 = vmatprep.mubr.f32.mxu0 0.0
        %713 = vmatmul.mubr.f32.gmra.mxu0 %v646
        %v714 = vpop.f32.mrf.mxu0
        %v715 = vadd.f32 %v571, %v714
        %v716 = vpop.f32.mrf.mxu0
        %v717 = vadd.f32 %v573, %v716
        %718 = vdwg.mxu0
        %719 = vmatprep.subr.mxu0 0.0
        %720 = vmatpush1.msra.mxu0 0.0
        %721 = vmatprep.subr.mxu0 0.0
        %722 = vmatpush1.msra.mxu0 0.0
        %723 = vmatprep.subr.mxu0 0.0
        %724 = vmatpush1.msra.mxu0 0.0
        %725 = vmatprep.subr.mxu0 0.0
        %726 = vmatpush1.msra.mxu0 0.0
        %727 = vmatprep.subr.mxu0 0.0
        %728 = vmatpush1.msra.mxu0 0.0
        %729 = vmatprep.subr.mxu0 0.0
        %730 = vmatpush1.msra.mxu0 0.0
        %731 = vmatprep.subr.mxu0 0.0
        %732 = vmatpush1.msra.mxu0 0.0
        %733 = vmatprep.subr.mxu0 0.0
        %734 = vmatpush1.msra.mxu0 0.0
        %735 = vmatprep.subr.mxu0 0.0
        %736 = vmatpush1.msra.mxu0 0.0
        %737 = vmatprep.subr.mxu0 0.0
        %738 = vmatpush1.msra.mxu0 0.0
        %739 = vmatprep.subr.mxu0 0.0
        %740 = vmatpush1.msra.mxu0 0.0
        %741 = vmatprep.subr.mxu0 0.0
        %742 = vmatpush1.msra.mxu0 0.0
        %743 = vmatprep.subr.mxu0 0.0
        %744 = vmatpush1.msra.mxu0 0.0
        %745 = vmatprep.subr.mxu0 0.0
        %746 = vmatpush1.msra.mxu0 0.0
        %747 = vmatprep.subr.mxu0 0.0
        %748 = vmatpush1.msra.mxu0 %v455
        %749 = vmatprep.subr.mxu0 0.0
        %750 = vmatpush1.msra.mxu0 %v453
        %751 = vmatprep.subr.mxu0 0.0
        %752 = vmatpush2.msra.mxu0 0.0
        %753 = vmatprep.subr.mxu0 0.0
        %754 = vmatpush2.msra.mxu0 0.0
        %755 = vmatprep.subr.mxu0 0.0
        %756 = vmatpush2.msra.mxu0 0.0
        %757 = vmatprep.subr.mxu0 0.0
        %758 = vmatpush2.msra.mxu0 0.0
        %759 = vmatprep.subr.mxu0 0.0
        %760 = vmatpush2.msra.mxu0 0.0
        %761 = vmatprep.subr.mxu0 0.0
        %762 = vmatpush2.msra.mxu0 0.0
        %763 = vmatprep.subr.mxu0 0.0
        %764 = vmatpush2.msra.mxu0 0.0
        %765 = vmatprep.subr.mxu0 0.0
        %766 = vmatpush2.msra.mxu0 0.0
        %767 = vmatprep.subr.mxu0 0.0
        %768 = vmatpush2.msra.mxu0 0.0
        %769 = vmatprep.subr.mxu0 0.0
        %770 = vmatpush2.msra.mxu0 0.0
        %771 = vmatprep.subr.mxu0 0.0
        %772 = vmatpush2.msra.mxu0 0.0
        %773 = vmatprep.subr.mxu0 0.0
        %774 = vmatpush2.msra.mxu0 0.0
        %775 = vmatprep.subr.mxu0 0.0
        %776 = vmatpush2.msra.mxu0 0.0
        %777 = vmatprep.subr.mxu0 0.0
        %778 = vmatpush2.msra.mxu0 0.0
        %779 = vmatprep.subr.mxu0 0.0
        %780 = vmatpush2.msra.mxu0 0.0
        %781 = vmatprep.subr.mxu0 0.0
        %782 = vmatpush2.msra.mxu0 0.0
        %783 = vmatprep.mubr.f32.mxu0 0.0
        %784 = vmatmul.mubr.f32.gmra.mxu0 %v646
        %v785 = vpop.f32.mrf.mxu0
        %v786 = vadd.f32 %v642, %v785
        %v787 = vpop.f32.mrf.mxu0
        %788 = vdwg.mxu0
        %s789 = scalar_lea.vmem %s3, 16
        %v790 = vld [vmem:[%s789] sm:$0xff]
        %791 = vrot.lane.b32.xlu0 %v452, 126
        %v792 = vpop.permute.xlu0 %791
        %793 = vrot.lane.b32.xlu0 %v456, 126
        %v794 = vpop.permute.xlu0 %793
        %795 = vrot.lane.b32.xlu0 %v453, 126
        %v796 = vpop.permute.xlu0 %795
        %797 = vrot.lane.b32.xlu0 %v454, 126
        %v798 = vpop.permute.xlu0 %797
        %799 = vrot.lane.b32.xlu0 %v457, 126
        %v800 = vpop.permute.xlu0 %799
        %801 = vrot.lane.b32.xlu0 %v455, 126
        %v802 = vpop.permute.xlu0 %801
        %vm803 = vcmask 1031168
        %v804 = vsel %vm803, %v792, %v794
        %v805 = vsel %vm803, %v794, %v796
        %v806 = vsel %vm803, %v798, %v800
        %v807 = vsel %vm803, %v800, %v802
        %v815 = vsel %vm500, %v790, 0
        %817 = vmatprep.subr.mxu0 0.0
        %818 = vmatpush1.msra.mxu0 0.0
        %819 = vmatprep.subr.mxu0 0.0
        %820 = vmatpush1.msra.mxu0 0.0
        %821 = vmatprep.subr.mxu0 0.0
        %822 = vmatpush1.msra.mxu0 0.0
        %823 = vmatprep.subr.mxu0 0.0
        %824 = vmatpush1.msra.mxu0 0.0
        %825 = vmatprep.subr.mxu0 0.0
        %826 = vmatpush1.msra.mxu0 0.0
        %827 = vmatprep.subr.mxu0 0.0
        %828 = vmatpush1.msra.mxu0 0.0
        %829 = vmatprep.subr.mxu0 0.0
        %830 = vmatpush1.msra.mxu0 0.0
        %831 = vmatprep.subr.mxu0 0.0
        %832 = vmatpush1.msra.mxu0 0.0
        %833 = vmatprep.subr.mxu0 0.0
        %834 = vmatpush1.msra.mxu0 0.0
        %835 = vmatprep.subr.mxu0 0.0
        %836 = vmatpush1.msra.mxu0 0.0
        %837 = vmatprep.subr.mxu0 0.0
        %838 = vmatpush1.msra.mxu0 0.0
        %839 = vmatprep.subr.mxu0 0.0
        %840 = vmatpush1.msra.mxu0 0.0
        %841 = vmatprep.subr.mxu0 0.0
        %842 = vmatpush1.msra.mxu0 0.0
        %843 = vmatprep.subr.mxu0 0.0
        %844 = vmatpush1.msra.mxu0 0.0
        %845 = vmatprep.subr.mxu0 %v807
        %846 = vmatpush1.msra.mxu0 %v806
        %847 = vmatprep.subr.mxu0 %v805
        %848 = vmatpush1.msra.mxu0 %v804
        %849 = vmatprep.subr.mxu0 0.0
        %850 = vmatpush2.msra.mxu0 0.0
        %851 = vmatprep.subr.mxu0 0.0
        %852 = vmatpush2.msra.mxu0 0.0
        %853 = vmatprep.subr.mxu0 0.0
        %854 = vmatpush2.msra.mxu0 0.0
        %855 = vmatprep.subr.mxu0 0.0
        %856 = vmatpush2.msra.mxu0 0.0
        %857 = vmatprep.subr.mxu0 0.0
        %858 = vmatpush2.msra.mxu0 0.0
        %859 = vmatprep.subr.mxu0 0.0
        %860 = vmatpush2.msra.mxu0 0.0
        %861 = vmatprep.subr.mxu0 0.0
        %862 = vmatpush2.msra.mxu0 0.0
        %863 = vmatprep.subr.mxu0 0.0
        %864 = vmatpush2.msra.mxu0 0.0
        %865 = vmatprep.subr.mxu0 0.0
        %866 = vmatpush2.msra.mxu0 0.0
        %867 = vmatprep.subr.mxu0 0.0
        %868 = vmatpush2.msra.mxu0 0.0
        %869 = vmatprep.subr.mxu0 0.0
        %870 = vmatpush2.msra.mxu0 0.0
        %871 = vmatprep.subr.mxu0 0.0
        %872 = vmatpush2.msra.mxu0 0.0
        %873 = vmatprep.subr.mxu0 0.0
        %874 = vmatpush2.msra.mxu0 0.0
        %875 = vmatprep.subr.mxu0 0.0
        %876 = vmatpush2.msra.mxu0 0.0
        %877 = vmatprep.subr.mxu0 0.0
        %878 = vmatpush2.msra.mxu0 0.0
        %879 = vmatprep.subr.mxu0 0.0
        %880 = vmatpush2.msra.mxu0 0.0
        %881 = vmatprep.mubr.f32.mxu0 0.0
        %882 = vmatmul.mubr.f32.gmra.mxu0 %v815
        %v883 = vpop.f32.mrf.mxu0
        %v884 = vadd.f32 0.0, %v883
        %v885 = vpop.f32.mrf.mxu0
        %v886 = vadd.f32 0.0, %v885
        %887 = vdwg.mxu0
        %888 = vmatprep.subr.mxu0 0.0
        %889 = vmatpush1.msra.mxu0 0.0
        %890 = vmatprep.subr.mxu0 0.0
        %891 = vmatpush1.msra.mxu0 0.0
        %892 = vmatprep.subr.mxu0 0.0
        %893 = vmatpush1.msra.mxu0 0.0
        %894 = vmatprep.subr.mxu0 0.0
        %895 = vmatpush1.msra.mxu0 0.0
        %896 = vmatprep.subr.mxu0 0.0
        %897 = vmatpush1.msra.mxu0 0.0
        %898 = vmatprep.subr.mxu0 0.0
        %899 = vmatpush1.msra.mxu0 0.0
        %900 = vmatprep.subr.mxu0 0.0
        %901 = vmatpush1.msra.mxu0 0.0
        %902 = vmatprep.subr.mxu0 0.0
        %903 = vmatpush1.msra.mxu0 0.0
        %904 = vmatprep.subr.mxu0 0.0
        %905 = vmatpush1.msra.mxu0 0.0
        %906 = vmatprep.subr.mxu0 0.0
        %907 = vmatpush1.msra.mxu0 0.0
        %908 = vmatprep.subr.mxu0 0.0
        %909 = vmatpush1.msra.mxu0 0.0
        %910 = vmatprep.subr.mxu0 0.0
        %911 = vmatpush1.msra.mxu0 0.0
        %912 = vmatprep.subr.mxu0 0.0
        %913 = vmatpush1.msra.mxu0 0.0
        %914 = vmatprep.subr.mxu0 0.0
        %915 = vmatpush1.msra.mxu0 0.0
        %916 = vmatprep.subr.mxu0 0.0
        %917 = vmatpush1.msra.mxu0 %v802
        %918 = vmatprep.subr.mxu0 0.0
        %919 = vmatpush1.msra.mxu0 %v796
        %920 = vmatprep.subr.mxu0 0.0
        %921 = vmatpush2.msra.mxu0 0.0
        %922 = vmatprep.subr.mxu0 0.0
        %923 = vmatpush2.msra.mxu0 0.0
        %924 = vmatprep.subr.mxu0 0.0
        %925 = vmatpush2.msra.mxu0 0.0
        %926 = vmatprep.subr.mxu0 0.0
        %927 = vmatpush2.msra.mxu0 0.0
        %928 = vmatprep.subr.mxu0 0.0
        %929 = vmatpush2.msra.mxu0 0.0
        %930 = vmatprep.subr.mxu0 0.0
        %931 = vmatpush2.msra.mxu0 0.0
        %932 = vmatprep.subr.mxu0 0.0
        %933 = vmatpush2.msra.mxu0 0.0
        %934 = vmatprep.subr.mxu0 0.0
        %935 = vmatpush2.msra.mxu0 0.0
        %936 = vmatprep.subr.mxu0 0.0
        %937 = vmatpush2.msra.mxu0 0.0
        %938 = vmatprep.subr.mxu0 0.0
        %939 = vmatpush2.msra.mxu0 0.0
        %940 = vmatprep.subr.mxu0 0.0
        %941 = vmatpush2.msra.mxu0 0.0
        %942 = vmatprep.subr.mxu0 0.0
        %943 = vmatpush2.msra.mxu0 0.0
        %944 = vmatprep.subr.mxu0 0.0
        %945 = vmatpush2.msra.mxu0 0.0
        %946 = vmatprep.subr.mxu0 0.0
        %947 = vmatpush2.msra.mxu0 0.0
        %948 = vmatprep.subr.mxu0 0.0
        %949 = vmatpush2.msra.mxu0 0.0
        %950 = vmatprep.subr.mxu0 0.0
        %951 = vmatpush2.msra.mxu0 0.0
        %952 = vmatprep.mubr.f32.mxu0 0.0
        %953 = vmatmul.mubr.f32.gmra.mxu0 %v815
        %v954 = vpop.f32.mrf.mxu0
        %v955 = vadd.f32 0.0, %v954
        %v956 = vpop.f32.mrf.mxu0
        %957 = vdwg.mxu0
        %v958 = vadd.f32 %v715, %v884
        %v959 = vadd.f32 %v717, %v886
        %v960 = vadd.f32 %v786, %v955
        %v961 = vld [vmem:[%s4] sm:$0xff]
        %963 = vset.pattern.permute.xlu0 0
        %964 = vperm.xlu0 %963, %v961
        %v965 = vpop.permute.xlu0 %964
        %v967 = vadd.f32 %v958, %v965
        %v968 = vadd.f32 %v959, %v965
        %v969 = vadd.f32 %v960, %v965
        %vm970 = vcmp.ge.s32.totalorder %v465, 0
        %vm971 = vcmp.ge.s32.totalorder %v466, 0
        %vm972 = vcmp.ge.s32.totalorder %v467, 0
        %vm973 = vcmp.lt.s32.totalorder %v465, 300
        %vm974 = vcmp.lt.s32.totalorder %v466, 300
        %vm975 = vcmp.lt.s32.totalorder %v467, 300
        %vm976 = vmand %vm970, %vm973
        %vm977 = vmand %vm971, %vm974
        %vm978 = vmand %vm972, %vm975
        %v979 = vmul.f32 %v967, 0.2
        %v980 = vmul.f32 %v968, 0.2
        %v981 = vmul.f32 %v969, 0.2
        %v982 = vmax.f32 %v967, %v979
        %v983 = vmax.f32 %v968, %v980
        %v984 = vmax.f32 %v969, %v981
        %v985 = vsel %vm976, 1, 0
        %v986 = vsel %vm977, 1, 0
        %v987 = vsel %vm978, 1, 0
        %vm988 = vcmp.eq.s32.totalorder %v985, 1
        %vm989 = vcmp.eq.s32.totalorder %v986, 1
        %vm990 = vcmp.eq.s32.totalorder %v987, 1
        %994 = vrot.lane.b32.xlu0 %v982, 1
        %v995 = vpop.permute.xlu0 %994
        %996 = vrot.lane.b32.xlu0 %v983, 1
        %v997 = vpop.permute.xlu0 %996
        %998 = vrot.lane.b32.xlu0 %v984, 1
        %v999 = vpop.permute.xlu0 %998
        %vm1000 = vcmask 7168
        %v1001 = vsel %vm1000, %v995, %v997
        %v1002 = vsel %vm1000, %v997, %v999
        %v1006 = vsel %vm988, %v995, 0.0
        %v1007 = vsel %vm989, %v1001, 0.0
        %v1008 = vsel %vm990, %v1002, 0.0
        %v1009 = vld [vmem:[%s5] sm:$0xf]
        %s1010 = scalar_lea.vmem %s5, 4
        %v1011 = vld [vmem:[%s1010] sm:$0xf]
        %1015 = vrot.lane.b32.xlu0 %v1006, 126
        %v1016 = vpop.permute.xlu0 %1015
        %1017 = vrot.lane.b32.xlu0 %v1007, 126
        %v1018 = vpop.permute.xlu0 %1017
        %1019 = vrot.lane.b32.xlu0 %v1008, 126
        %v1020 = vpop.permute.xlu0 %1019
        %v1021 = vsel %vm803, %v1016, %v1018
        %v1022 = vsel %vm803, %v1018, %v1020
        %vm1026 = vcmask 64512
        %v1028 = vsel %vm1026, %v1011, 0
        %1030 = vmatprep.subr.mxu0 0.0
        %1031 = vmatpush1.msra.mxu0 0.0
        %1032 = vmatprep.subr.mxu0 0.0
        %1033 = vmatpush1.msra.mxu0 0.0
        %1034 = vmatprep.subr.mxu0 0.0
        %1035 = vmatpush1.msra.mxu0 0.0
        %1036 = vmatprep.subr.mxu0 0.0
        %1037 = vmatpush1.msra.mxu0 0.0
        %1038 = vmatprep.subr.mxu0 0.0
        %1039 = vmatpush1.msra.mxu0 0.0
        %1040 = vmatprep.subr.mxu0 0.0
        %1041 = vmatpush1.msra.mxu0 0.0
        %1042 = vmatprep.subr.mxu0 0.0
        %1043 = vmatpush1.msra.mxu0 0.0
        %1044 = vmatprep.subr.mxu0 0.0
        %1045 = vmatpush1.msra.mxu0 0.0
        %1046 = vmatprep.subr.mxu0 0.0
        %1047 = vmatpush1.msra.mxu0 0.0
        %1048 = vmatprep.subr.mxu0 0.0
        %1049 = vmatpush1.msra.mxu0 0.0
        %1050 = vmatprep.subr.mxu0 0.0
        %1051 = vmatpush1.msra.mxu0 0.0
        %1052 = vmatprep.subr.mxu0 0.0
        %1053 = vmatpush1.msra.mxu0 0.0
        %1054 = vmatprep.subr.mxu0 0.0
        %1055 = vmatpush1.msra.mxu0 0.0
        %1056 = vmatprep.subr.mxu0 0.0
        %1057 = vmatpush1.msra.mxu0 0.0
        %1058 = vmatprep.subr.mxu0 0.0
        %1059 = vmatpush1.msra.mxu0 0.0
        %1060 = vmatprep.subr.mxu0 %v1022
        %1061 = vmatpush1.msra.mxu0 %v1021
        %1062 = vmatprep.subr.mxu0 0.0
        %1063 = vmatpush2.msra.mxu0 0.0
        %1064 = vmatprep.subr.mxu0 0.0
        %1065 = vmatpush2.msra.mxu0 0.0
        %1066 = vmatprep.subr.mxu0 0.0
        %1067 = vmatpush2.msra.mxu0 0.0
        %1068 = vmatprep.subr.mxu0 0.0
        %1069 = vmatpush2.msra.mxu0 0.0
        %1070 = vmatprep.subr.mxu0 0.0
        %1071 = vmatpush2.msra.mxu0 0.0
        %1072 = vmatprep.subr.mxu0 0.0
        %1073 = vmatpush2.msra.mxu0 0.0
        %1074 = vmatprep.subr.mxu0 0.0
        %1075 = vmatpush2.msra.mxu0 0.0
        %1076 = vmatprep.subr.mxu0 0.0
        %1077 = vmatpush2.msra.mxu0 0.0
        %1078 = vmatprep.subr.mxu0 0.0
        %1079 = vmatpush2.msra.mxu0 0.0
        %1080 = vmatprep.subr.mxu0 0.0
        %1081 = vmatpush2.msra.mxu0 0.0
        %1082 = vmatprep.subr.mxu0 0.0
        %1083 = vmatpush2.msra.mxu0 0.0
        %1084 = vmatprep.subr.mxu0 0.0
        %1085 = vmatpush2.msra.mxu0 0.0
        %1086 = vmatprep.subr.mxu0 0.0
        %1087 = vmatpush2.msra.mxu0 0.0
        %1088 = vmatprep.subr.mxu0 0.0
        %1089 = vmatpush2.msra.mxu0 0.0
        %1090 = vmatprep.subr.mxu0 0.0
        %1091 = vmatpush2.msra.mxu0 0.0
        %1092 = vmatprep.subr.mxu0 0.0
        %1093 = vmatpush2.msra.mxu0 0.0
        %1094 = vmatprep.mubr.f32.mxu0 0.0
        %1095 = vmatmul.mubr.f32.gmra.mxu0 %v1028
        %v1096 = vpop.f32.mrf.mxu0
        %v1097 = vadd.f32 0.0, %v1096
        %v1098 = vpop.f32.mrf.mxu0
        %v1099 = vadd.f32 0.0, %v1098
        %1100 = vdwg.mxu0
        %1101 = vmatprep.subr.mxu0 0.0
        %1102 = vmatpush1.msra.mxu0 0.0
        %1103 = vmatprep.subr.mxu0 0.0
        %1104 = vmatpush1.msra.mxu0 0.0
        %1105 = vmatprep.subr.mxu0 0.0
        %1106 = vmatpush1.msra.mxu0 0.0
        %1107 = vmatprep.subr.mxu0 0.0
        %1108 = vmatpush1.msra.mxu0 0.0
        %1109 = vmatprep.subr.mxu0 0.0
        %1110 = vmatpush1.msra.mxu0 0.0
        %1111 = vmatprep.subr.mxu0 0.0
        %1112 = vmatpush1.msra.mxu0 0.0
        %1113 = vmatprep.subr.mxu0 0.0
        %1114 = vmatpush1.msra.mxu0 0.0
        %1115 = vmatprep.subr.mxu0 0.0
        %1116 = vmatpush1.msra.mxu0 0.0
        %1117 = vmatprep.subr.mxu0 0.0
        %1118 = vmatpush1.msra.mxu0 0.0
        %1119 = vmatprep.subr.mxu0 0.0
        %1120 = vmatpush1.msra.mxu0 0.0
        %1121 = vmatprep.subr.mxu0 0.0
        %1122 = vmatpush1.msra.mxu0 0.0
        %1123 = vmatprep.subr.mxu0 0.0
        %1124 = vmatpush1.msra.mxu0 0.0
        %1125 = vmatprep.subr.mxu0 0.0
        %1126 = vmatpush1.msra.mxu0 0.0
        %1127 = vmatprep.subr.mxu0 0.0
        %1128 = vmatpush1.msra.mxu0 0.0
        %1129 = vmatprep.subr.mxu0 0.0
        %1130 = vmatpush1.msra.mxu0 0.0
        %1131 = vmatprep.subr.mxu0 0.0
        %1132 = vmatpush1.msra.mxu0 %v1020
        %1133 = vmatprep.subr.mxu0 0.0
        %1134 = vmatpush2.msra.mxu0 0.0
        %1135 = vmatprep.subr.mxu0 0.0
        %1136 = vmatpush2.msra.mxu0 0.0
        %1137 = vmatprep.subr.mxu0 0.0
        %1138 = vmatpush2.msra.mxu0 0.0
        %1139 = vmatprep.subr.mxu0 0.0
        %1140 = vmatpush2.msra.mxu0 0.0
        %1141 = vmatprep.subr.mxu0 0.0
        %1142 = vmatpush2.msra.mxu0 0.0
        %1143 = vmatprep.subr.mxu0 0.0
        %1144 = vmatpush2.msra.mxu0 0.0
        %1145 = vmatprep.subr.mxu0 0.0
        %1146 = vmatpush2.msra.mxu0 0.0
        %1147 = vmatprep.subr.mxu0 0.0
        %1148 = vmatpush2.msra.mxu0 0.0
        %1149 = vmatprep.subr.mxu0 0.0
        %1150 = vmatpush2.msra.mxu0 0.0
        %1151 = vmatprep.subr.mxu0 0.0
        %1152 = vmatpush2.msra.mxu0 0.0
        %1153 = vmatprep.subr.mxu0 0.0
        %1154 = vmatpush2.msra.mxu0 0.0
        %1155 = vmatprep.subr.mxu0 0.0
        %1156 = vmatpush2.msra.mxu0 0.0
        %1157 = vmatprep.subr.mxu0 0.0
        %1158 = vmatpush2.msra.mxu0 0.0
        %1159 = vmatprep.subr.mxu0 0.0
        %1160 = vmatpush2.msra.mxu0 0.0
        %1161 = vmatprep.subr.mxu0 0.0
        %1162 = vmatpush2.msra.mxu0 0.0
        %1163 = vmatprep.subr.mxu0 0.0
        %1164 = vmatpush2.msra.mxu0 0.0
        %1165 = vmatprep.mubr.f32.mxu0 0.0
        %1166 = vmatmul.mubr.f32.gmra.mxu0 %v1028
        %v1167 = vpop.f32.mrf.mxu0
        %v1168 = vadd.f32 0.0, %v1167
        %v1169 = vpop.f32.mrf.mxu0
        %1170 = vdwg.mxu0
        %1171 = vrot.lane.b32.xlu0 %v1006, 127
        %v1172 = vpop.permute.xlu0 %1171
        %1173 = vrot.lane.b32.xlu0 %v1007, 127
        %v1174 = vpop.permute.xlu0 %1173
        %1175 = vrot.lane.b32.xlu0 %v1008, 127
        %v1176 = vpop.permute.xlu0 %1175
        %v1177 = vsel %vm489, %v1172, %v1174
        %v1178 = vsel %vm489, %v1174, %v1176
        %v1183 = vsel %vm1026, %v1009, 0
        %1185 = vmatprep.subr.mxu0 0.0
        %1186 = vmatpush1.msra.mxu0 0.0
        %1187 = vmatprep.subr.mxu0 0.0
        %1188 = vmatpush1.msra.mxu0 0.0
        %1189 = vmatprep.subr.mxu0 0.0
        %1190 = vmatpush1.msra.mxu0 0.0
        %1191 = vmatprep.subr.mxu0 0.0
        %1192 = vmatpush1.msra.mxu0 0.0
        %1193 = vmatprep.subr.mxu0 0.0
        %1194 = vmatpush1.msra.mxu0 0.0
        %1195 = vmatprep.subr.mxu0 0.0
        %1196 = vmatpush1.msra.mxu0 0.0
        %1197 = vmatprep.subr.mxu0 0.0
        %1198 = vmatpush1.msra.mxu0 0.0
        %1199 = vmatprep.subr.mxu0 0.0
        %1200 = vmatpush1.msra.mxu0 0.0
        %1201 = vmatprep.subr.mxu0 0.0
        %1202 = vmatpush1.msra.mxu0 0.0
        %1203 = vmatprep.subr.mxu0 0.0
        %1204 = vmatpush1.msra.mxu0 0.0
        %1205 = vmatprep.subr.mxu0 0.0
        %1206 = vmatpush1.msra.mxu0 0.0
        %1207 = vmatprep.subr.mxu0 0.0
        %1208 = vmatpush1.msra.mxu0 0.0
        %1209 = vmatprep.subr.mxu0 0.0
        %1210 = vmatpush1.msra.mxu0 0.0
        %1211 = vmatprep.subr.mxu0 0.0
        %1212 = vmatpush1.msra.mxu0 0.0
        %1213 = vmatprep.subr.mxu0 0.0
        %1214 = vmatpush1.msra.mxu0 0.0
        %1215 = vmatprep.subr.mxu0 %v1178
        %1216 = vmatpush1.msra.mxu0 %v1177
        %1217 = vmatprep.subr.mxu0 0.0
        %1218 = vmatpush2.msra.mxu0 0.0
        %1219 = vmatprep.subr.mxu0 0.0
        %1220 = vmatpush2.msra.mxu0 0.0
        %1221 = vmatprep.subr.mxu0 0.0
        %1222 = vmatpush2.msra.mxu0 0.0
        %1223 = vmatprep.subr.mxu0 0.0
        %1224 = vmatpush2.msra.mxu0 0.0
        %1225 = vmatprep.subr.mxu0 0.0
        %1226 = vmatpush2.msra.mxu0 0.0
        %1227 = vmatprep.subr.mxu0 0.0
        %1228 = vmatpush2.msra.mxu0 0.0
        %1229 = vmatprep.subr.mxu0 0.0
        %1230 = vmatpush2.msra.mxu0 0.0
        %1231 = vmatprep.subr.mxu0 0.0
        %1232 = vmatpush2.msra.mxu0 0.0
        %1233 = vmatprep.subr.mxu0 0.0
        %1234 = vmatpush2.msra.mxu0 0.0
        %1235 = vmatprep.subr.mxu0 0.0
        %1236 = vmatpush2.msra.mxu0 0.0
        %1237 = vmatprep.subr.mxu0 0.0
        %1238 = vmatpush2.msra.mxu0 0.0
        %1239 = vmatprep.subr.mxu0 0.0
        %1240 = vmatpush2.msra.mxu0 0.0
        %1241 = vmatprep.subr.mxu0 0.0
        %1242 = vmatpush2.msra.mxu0 0.0
        %1243 = vmatprep.subr.mxu0 0.0
        %1244 = vmatpush2.msra.mxu0 0.0
        %1245 = vmatprep.subr.mxu0 0.0
        %1246 = vmatpush2.msra.mxu0 0.0
        %1247 = vmatprep.subr.mxu0 0.0
        %1248 = vmatpush2.msra.mxu0 0.0
        %1249 = vmatprep.mubr.f32.mxu0 0.0
        %1250 = vmatmul.mubr.f32.gmra.mxu0 %v1183
        %v1251 = vpop.f32.mrf.mxu0
        %v1252 = vadd.f32 %v1097, %v1251
        %v1253 = vpop.f32.mrf.mxu0
        %v1254 = vadd.f32 %v1099, %v1253
        %1255 = vdwg.mxu0
        %1256 = vmatprep.subr.mxu0 0.0
        %1257 = vmatpush1.msra.mxu0 0.0
        %1258 = vmatprep.subr.mxu0 0.0
        %1259 = vmatpush1.msra.mxu0 0.0
        %1260 = vmatprep.subr.mxu0 0.0
        %1261 = vmatpush1.msra.mxu0 0.0
        %1262 = vmatprep.subr.mxu0 0.0
        %1263 = vmatpush1.msra.mxu0 0.0
        %1264 = vmatprep.subr.mxu0 0.0
        %1265 = vmatpush1.msra.mxu0 0.0
        %1266 = vmatprep.subr.mxu0 0.0
        %1267 = vmatpush1.msra.mxu0 0.0
        %1268 = vmatprep.subr.mxu0 0.0
        %1269 = vmatpush1.msra.mxu0 0.0
        %1270 = vmatprep.subr.mxu0 0.0
        %1271 = vmatpush1.msra.mxu0 0.0
        %1272 = vmatprep.subr.mxu0 0.0
        %1273 = vmatpush1.msra.mxu0 0.0
        %1274 = vmatprep.subr.mxu0 0.0
        %1275 = vmatpush1.msra.mxu0 0.0
        %1276 = vmatprep.subr.mxu0 0.0
        %1277 = vmatpush1.msra.mxu0 0.0
        %1278 = vmatprep.subr.mxu0 0.0
        %1279 = vmatpush1.msra.mxu0 0.0
        %1280 = vmatprep.subr.mxu0 0.0
        %1281 = vmatpush1.msra.mxu0 0.0
        %1282 = vmatprep.subr.mxu0 0.0
        %1283 = vmatpush1.msra.mxu0 0.0
        %1284 = vmatprep.subr.mxu0 0.0
        %1285 = vmatpush1.msra.mxu0 0.0
        %1286 = vmatprep.subr.mxu0 0.0
        %1287 = vmatpush1.msra.mxu0 %v1176
        %1288 = vmatprep.subr.mxu0 0.0
        %1289 = vmatpush2.msra.mxu0 0.0
        %1290 = vmatprep.subr.mxu0 0.0
        %1291 = vmatpush2.msra.mxu0 0.0
        %1292 = vmatprep.subr.mxu0 0.0
        %1293 = vmatpush2.msra.mxu0 0.0
        %1294 = vmatprep.subr.mxu0 0.0
        %1295 = vmatpush2.msra.mxu0 0.0
        %1296 = vmatprep.subr.mxu0 0.0
        %1297 = vmatpush2.msra.mxu0 0.0
        %1298 = vmatprep.subr.mxu0 0.0
        %1299 = vmatpush2.msra.mxu0 0.0
        %1300 = vmatprep.subr.mxu0 0.0
        %1301 = vmatpush2.msra.mxu0 0.0
        %1302 = vmatprep.subr.mxu0 0.0
        %1303 = vmatpush2.msra.mxu0 0.0
        %1304 = vmatprep.subr.mxu0 0.0
        %1305 = vmatpush2.msra.mxu0 0.0
        %1306 = vmatprep.subr.mxu0 0.0
        %1307 = vmatpush2.msra.mxu0 0.0
        %1308 = vmatprep.subr.mxu0 0.0
        %1309 = vmatpush2.msra.mxu0 0.0
        %1310 = vmatprep.subr.mxu0 0.0
        %1311 = vmatpush2.msra.mxu0 0.0
        %1312 = vmatprep.subr.mxu0 0.0
        %1313 = vmatpush2.msra.mxu0 0.0
        %1314 = vmatprep.subr.mxu0 0.0
        %1315 = vmatpush2.msra.mxu0 0.0
        %1316 = vmatprep.subr.mxu0 0.0
        %1317 = vmatpush2.msra.mxu0 0.0
        %1318 = vmatprep.subr.mxu0 0.0
        %1319 = vmatpush2.msra.mxu0 0.0
        %1320 = vmatprep.mubr.f32.mxu0 0.0
        %1321 = vmatmul.mubr.f32.gmra.mxu0 %v1183
        %v1322 = vpop.f32.mrf.mxu0
        %v1323 = vadd.f32 %v1168, %v1322
        %v1324 = vpop.f32.mrf.mxu0
        %1325 = vdwg.mxu0
        %s1326 = scalar_lea.vmem %s5, 8
        %v1327 = vld [vmem:[%s1326] sm:$0xf]
        %1328 = vrot.lane.b32.xlu0 %v1006, 125
        %v1329 = vpop.permute.xlu0 %1328
        %1330 = vrot.lane.b32.xlu0 %v1007, 125
        %v1331 = vpop.permute.xlu0 %1330
        %1332 = vrot.lane.b32.xlu0 %v1008, 125
        %v1333 = vpop.permute.xlu0 %1332
        %vm1334 = vcmask 1022976
        %v1335 = vsel %vm1334, %v1329, %v1331
        %v1336 = vsel %vm1334, %v1331, %v1333
        %v1341 = vsel %vm1026, %v1327, 0
        %1343 = vmatprep.subr.mxu0 0.0
        %1344 = vmatpush1.msra.mxu0 0.0
        %1345 = vmatprep.subr.mxu0 0.0
        %1346 = vmatpush1.msra.mxu0 0.0
        %1347 = vmatprep.subr.mxu0 0.0
        %1348 = vmatpush1.msra.mxu0 0.0
        %1349 = vmatprep.subr.mxu0 0.0
        %1350 = vmatpush1.msra.mxu0 0.0
        %1351 = vmatprep.subr.mxu0 0.0
        %1352 = vmatpush1.msra.mxu0 0.0
        %1353 = vmatprep.subr.mxu0 0.0
        %1354 = vmatpush1.msra.mxu0 0.0
        %1355 = vmatprep.subr.mxu0 0.0
        %1356 = vmatpush1.msra.mxu0 0.0
        %1357 = vmatprep.subr.mxu0 0.0
        %1358 = vmatpush1.msra.mxu0 0.0
        %1359 = vmatprep.subr.mxu0 0.0
        %1360 = vmatpush1.msra.mxu0 0.0
        %1361 = vmatprep.subr.mxu0 0.0
        %1362 = vmatpush1.msra.mxu0 0.0
        %1363 = vmatprep.subr.mxu0 0.0
        %1364 = vmatpush1.msra.mxu0 0.0
        %1365 = vmatprep.subr.mxu0 0.0
        %1366 = vmatpush1.msra.mxu0 0.0
        %1367 = vmatprep.subr.mxu0 0.0
        %1368 = vmatpush1.msra.mxu0 0.0
        %1369 = vmatprep.subr.mxu0 0.0
        %1370 = vmatpush1.msra.mxu0 0.0
        %1371 = vmatprep.subr.mxu0 0.0
        %1372 = vmatpush1.msra.mxu0 0.0
        %1373 = vmatprep.subr.mxu0 %v1336
        %1374 = vmatpush1.msra.mxu0 %v1335
        %1375 = vmatprep.subr.mxu0 0.0
        %1376 = vmatpush2.msra.mxu0 0.0
        %1377 = vmatprep.subr.mxu0 0.0
        %1378 = vmatpush2.msra.mxu0 0.0
        %1379 = vmatprep.subr.mxu0 0.0
        %1380 = vmatpush2.msra.mxu0 0.0
        %1381 = vmatprep.subr.mxu0 0.0
        %1382 = vmatpush2.msra.mxu0 0.0
        %1383 = vmatprep.subr.mxu0 0.0
        %1384 = vmatpush2.msra.mxu0 0.0
        %1385 = vmatprep.subr.mxu0 0.0
        %1386 = vmatpush2.msra.mxu0 0.0
        %1387 = vmatprep.subr.mxu0 0.0
        %1388 = vmatpush2.msra.mxu0 0.0
        %1389 = vmatprep.subr.mxu0 0.0
        %1390 = vmatpush2.msra.mxu0 0.0
        %1391 = vmatprep.subr.mxu0 0.0
        %1392 = vmatpush2.msra.mxu0 0.0
        %1393 = vmatprep.subr.mxu0 0.0
        %1394 = vmatpush2.msra.mxu0 0.0
        %1395 = vmatprep.subr.mxu0 0.0
        %1396 = vmatpush2.msra.mxu0 0.0
        %1397 = vmatprep.subr.mxu0 0.0
        %1398 = vmatpush2.msra.mxu0 0.0
        %1399 = vmatprep.subr.mxu0 0.0
        %1400 = vmatpush2.msra.mxu0 0.0
        %1401 = vmatprep.subr.mxu0 0.0
        %1402 = vmatpush2.msra.mxu0 0.0
        %1403 = vmatprep.subr.mxu0 0.0
        %1404 = vmatpush2.msra.mxu0 0.0
        %1405 = vmatprep.subr.mxu0 0.0
        %1406 = vmatpush2.msra.mxu0 0.0
        %1407 = vmatprep.mubr.f32.mxu0 0.0
        %1408 = vmatmul.mubr.f32.gmra.mxu0 %v1341
        %v1409 = vpop.f32.mrf.mxu0
        %v1410 = vadd.f32 0.0, %v1409
        %v1411 = vpop.f32.mrf.mxu0
        %v1412 = vadd.f32 0.0, %v1411
        %1413 = vdwg.mxu0
        %1414 = vmatprep.subr.mxu0 0.0
        %1415 = vmatpush1.msra.mxu0 0.0
        %1416 = vmatprep.subr.mxu0 0.0
        %1417 = vmatpush1.msra.mxu0 0.0
        %1418 = vmatprep.subr.mxu0 0.0
        %1419 = vmatpush1.msra.mxu0 0.0
        %1420 = vmatprep.subr.mxu0 0.0
        %1421 = vmatpush1.msra.mxu0 0.0
        %1422 = vmatprep.subr.mxu0 0.0
        %1423 = vmatpush1.msra.mxu0 0.0
        %1424 = vmatprep.subr.mxu0 0.0
        %1425 = vmatpush1.msra.mxu0 0.0
        %1426 = vmatprep.subr.mxu0 0.0
        %1427 = vmatpush1.msra.mxu0 0.0
        %1428 = vmatprep.subr.mxu0 0.0
        %1429 = vmatpush1.msra.mxu0 0.0
        %1430 = vmatprep.subr.mxu0 0.0
        %1431 = vmatpush1.msra.mxu0 0.0
        %1432 = vmatprep.subr.mxu0 0.0
        %1433 = vmatpush1.msra.mxu0 0.0
        %1434 = vmatprep.subr.mxu0 0.0
        %1435 = vmatpush1.msra.mxu0 0.0
        %1436 = vmatprep.subr.mxu0 0.0
        %1437 = vmatpush1.msra.mxu0 0.0
        %1438 = vmatprep.subr.mxu0 0.0
        %1439 = vmatpush1.msra.mxu0 0.0
        %1440 = vmatprep.subr.mxu0 0.0
        %1441 = vmatpush1.msra.mxu0 0.0
        %1442 = vmatprep.subr.mxu0 0.0
        %1443 = vmatpush1.msra.mxu0 0.0
        %1444 = vmatprep.subr.mxu0 0.0
        %1445 = vmatpush1.msra.mxu0 %v1333
        %1446 = vmatprep.subr.mxu0 0.0
        %1447 = vmatpush2.msra.mxu0 0.0
        %1448 = vmatprep.subr.mxu0 0.0
        %1449 = vmatpush2.msra.mxu0 0.0
        %1450 = vmatprep.subr.mxu0 0.0
        %1451 = vmatpush2.msra.mxu0 0.0
        %1452 = vmatprep.subr.mxu0 0.0
        %1453 = vmatpush2.msra.mxu0 0.0
        %1454 = vmatprep.subr.mxu0 0.0
        %1455 = vmatpush2.msra.mxu0 0.0
        %1456 = vmatprep.subr.mxu0 0.0
        %1457 = vmatpush2.msra.mxu0 0.0
        %1458 = vmatprep.subr.mxu0 0.0
        %1459 = vmatpush2.msra.mxu0 0.0
        %1460 = vmatprep.subr.mxu0 0.0
        %1461 = vmatpush2.msra.mxu0 0.0
        %1462 = vmatprep.subr.mxu0 0.0
        %1463 = vmatpush2.msra.mxu0 0.0
        %1464 = vmatprep.subr.mxu0 0.0
        %1465 = vmatpush2.msra.mxu0 0.0
        %1466 = vmatprep.subr.mxu0 0.0
        %1467 = vmatpush2.msra.mxu0 0.0
        %1468 = vmatprep.subr.mxu0 0.0
        %1469 = vmatpush2.msra.mxu0 0.0
        %1470 = vmatprep.subr.mxu0 0.0
        %1471 = vmatpush2.msra.mxu0 0.0
        %1472 = vmatprep.subr.mxu0 0.0
        %1473 = vmatpush2.msra.mxu0 0.0
        %1474 = vmatprep.subr.mxu0 0.0
        %1475 = vmatpush2.msra.mxu0 0.0
        %1476 = vmatprep.subr.mxu0 0.0
        %1477 = vmatpush2.msra.mxu0 0.0
        %1478 = vmatprep.mubr.f32.mxu0 0.0
        %1479 = vmatmul.mubr.f32.gmra.mxu0 %v1341
        %v1480 = vpop.f32.mrf.mxu0
        %v1481 = vadd.f32 0.0, %v1480
        %v1482 = vpop.f32.mrf.mxu0
        %1483 = vdwg.mxu0
        %v1484 = vadd.f32 %v1252, %v1410
        %v1485 = vadd.f32 %v1254, %v1412
        %v1486 = vadd.f32 %v1323, %v1481
        %v1487 = vld [vmem:[%s6] sm:$0xf]
        %1489 = vset.pattern.permute.xlu0 0
        %1490 = vperm.xlu0 %1489, %v1487
        %v1491 = vpop.permute.xlu0 %1490
        %v1493 = vadd.f32 %v1484, %v1491
        %v1494 = vadd.f32 %v1485, %v1491
        %v1495 = vadd.f32 %v1486, %v1491
        %v1496 = vmul.f32 %v1493, 0.2
        %v1497 = vmul.f32 %v1494, 0.2
        %v1498 = vmul.f32 %v1495, 0.2
        %v1499 = vmax.f32 %v1493, %v1496
        %v1500 = vmax.f32 %v1494, %v1497
        %v1501 = vmax.f32 %v1495, %v1498
        %1505 = vrot.lane.b32.xlu0 %v1499, 2
        %v1506 = vpop.permute.xlu0 %1505
        %1507 = vrot.lane.b32.xlu0 %v1500, 2
        %v1508 = vpop.permute.xlu0 %1507
        %1509 = vrot.lane.b32.xlu0 %v1501, 2
        %v1510 = vpop.permute.xlu0 %1509
        %vm1511 = vcmask 15360
        %v1512 = vsel %vm1511, %v1506, %v1508
        %v1513 = vsel %vm1511, %v1508, %v1510
        %v1517 = vsel %vm988, %v1506, 0.0
        %v1518 = vsel %vm989, %v1512, 0.0
        %v1519 = vsel %vm990, %v1513, 0.0
        %v1520 = vld [vmem:[%s7] sm:$0xf]
        %s1521 = scalar_lea.vmem %s7, 4
        %v1522 = vld [vmem:[%s1521] sm:$0xf]
        %1526 = vrot.lane.b32.xlu0 %v1517, 125
        %v1527 = vpop.permute.xlu0 %1526
        %1528 = vrot.lane.b32.xlu0 %v1518, 125
        %v1529 = vpop.permute.xlu0 %1528
        %1530 = vrot.lane.b32.xlu0 %v1519, 125
        %v1531 = vpop.permute.xlu0 %1530
        %v1532 = vsel %vm1334, %v1527, %v1529
        %v1533 = vsel %vm1334, %v1529, %v1531
        %vm1534 = vcmask 31744
        %v1536 = vsel %vm1534, %v1522, 0
        %vm1538 = vcmask 1043456
        %v1539 = vsel %vm1538, %v1532, 0
        %v1541 = vsel %vm1538, %v1533, 0
        %1543 = vmatprep.subr.mxu0 0.0
        %1544 = vmatpush1.msra.mxu0 0.0
        %1545 = vmatprep.subr.mxu0 0.0
        %1546 = vmatpush1.msra.mxu0 0.0
        %1547 = vmatprep.subr.mxu0 0.0
        %1548 = vmatpush1.msra.mxu0 0.0
        %1549 = vmatprep.subr.mxu0 0.0
        %1550 = vmatpush1.msra.mxu0 0.0
        %1551 = vmatprep.subr.mxu0 0.0
        %1552 = vmatpush1.msra.mxu0 0.0
        %1553 = vmatprep.subr.mxu0 0.0
        %1554 = vmatpush1.msra.mxu0 0.0
        %1555 = vmatprep.subr.mxu0 0.0
        %1556 = vmatpush1.msra.mxu0 0.0
        %1557 = vmatprep.subr.mxu0 0.0
        %1558 = vmatpush1.msra.mxu0 0.0
        %1559 = vmatprep.subr.mxu0 0.0
        %1560 = vmatpush1.msra.mxu0 0.0
        %1561 = vmatprep.subr.mxu0 0.0
        %1562 = vmatpush1.msra.mxu0 0.0
        %1563 = vmatprep.subr.mxu0 0.0
        %1564 = vmatpush1.msra.mxu0 0.0
        %1565 = vmatprep.subr.mxu0 0.0
        %1566 = vmatpush1.msra.mxu0 0.0
        %1567 = vmatprep.subr.mxu0 0.0
        %1568 = vmatpush1.msra.mxu0 0.0
        %1569 = vmatprep.subr.mxu0 0.0
        %1570 = vmatpush1.msra.mxu0 0.0
        %1571 = vmatprep.subr.mxu0 0.0
        %1572 = vmatpush1.msra.mxu0 0.0
        %1573 = vmatprep.subr.mxu0 %v1541
        %1574 = vmatpush1.msra.mxu0 %v1539
        %1575 = vmatprep.subr.mxu0 0.0
        %1576 = vmatpush2.msra.mxu0 0.0
        %1577 = vmatprep.subr.mxu0 0.0
        %1578 = vmatpush2.msra.mxu0 0.0
        %1579 = vmatprep.subr.mxu0 0.0
        %1580 = vmatpush2.msra.mxu0 0.0
        %1581 = vmatprep.subr.mxu0 0.0
        %1582 = vmatpush2.msra.mxu0 0.0
        %1583 = vmatprep.subr.mxu0 0.0
        %1584 = vmatpush2.msra.mxu0 0.0
        %1585 = vmatprep.subr.mxu0 0.0
        %1586 = vmatpush2.msra.mxu0 0.0
        %1587 = vmatprep.subr.mxu0 0.0
        %1588 = vmatpush2.msra.mxu0 0.0
        %1589 = vmatprep.subr.mxu0 0.0
        %1590 = vmatpush2.msra.mxu0 0.0
        %1591 = vmatprep.subr.mxu0 0.0
        %1592 = vmatpush2.msra.mxu0 0.0
        %1593 = vmatprep.subr.mxu0 0.0
        %1594 = vmatpush2.msra.mxu0 0.0
        %1595 = vmatprep.subr.mxu0 0.0
        %1596 = vmatpush2.msra.mxu0 0.0
        %1597 = vmatprep.subr.mxu0 0.0
        %1598 = vmatpush2.msra.mxu0 0.0
        %1599 = vmatprep.subr.mxu0 0.0
        %1600 = vmatpush2.msra.mxu0 0.0
        %1601 = vmatprep.subr.mxu0 0.0
        %1602 = vmatpush2.msra.mxu0 0.0
        %1603 = vmatprep.subr.mxu0 0.0
        %1604 = vmatpush2.msra.mxu0 0.0
        %1605 = vmatprep.subr.mxu0 0.0
        %1606 = vmatpush2.msra.mxu0 0.0
        %1607 = vmatprep.mubr.f32.mxu0 0.0
        %1608 = vmatmul.mubr.f32.gmra.mxu0 %v1536
        %v1609 = vpop.f32.mrf.mxu0
        %v1610 = vadd.f32 0.0, %v1609
        %v1611 = vpop.f32.mrf.mxu0
        %v1612 = vadd.f32 0.0, %v1611
        %1613 = vdwg.mxu0
        %1614 = vrot.lane.b32.xlu0 %v1517, 126
        %v1615 = vpop.permute.xlu0 %1614
        %1616 = vrot.lane.b32.xlu0 %v1518, 126
        %v1617 = vpop.permute.xlu0 %1616
        %1618 = vrot.lane.b32.xlu0 %v1519, 126
        %v1619 = vpop.permute.xlu0 %1618
        %v1620 = vsel %vm803, %v1615, %v1617
        %v1621 = vsel %vm803, %v1617, %v1619
        %v1623 = vsel %vm1534, %v1520, 0
        %v1625 = vsel %vm1538, %v1620, 0
        %v1627 = vsel %vm1538, %v1621, 0
        %1629 = vmatprep.subr.mxu0 0.0
        %1630 = vmatpush1.msra.mxu0 0.0
        %1631 = vmatprep.subr.mxu0 0.0
        %1632 = vmatpush1.msra.mxu0 0.0
        %1633 = vmatprep.subr.mxu0 0.0
        %1634 = vmatpush1.msra.mxu0 0.0
        %1635 = vmatprep.subr.mxu0 0.0
        %1636 = vmatpush1.msra.mxu0 0.0
        %1637 = vmatprep.subr.mxu0 0.0
        %1638 = vmatpush1.msra.mxu0 0.0
        %1639 = vmatprep.subr.mxu0 0.0
        %1640 = vmatpush1.msra.mxu0 0.0
        %1641 = vmatprep.subr.mxu0 0.0
        %1642 = vmatpush1.msra.mxu0 0.0
        %1643 = vmatprep.subr.mxu0 0.0
        %1644 = vmatpush1.msra.mxu0 0.0
        %1645 = vmatprep.subr.mxu0 0.0
        %1646 = vmatpush1.msra.mxu0 0.0
        %1647 = vmatprep.subr.mxu0 0.0
        %1648 = vmatpush1.msra.mxu0 0.0
        %1649 = vmatprep.subr.mxu0 0.0
        %1650 = vmatpush1.msra.mxu0 0.0
        %1651 = vmatprep.subr.mxu0 0.0
        %1652 = vmatpush1.msra.mxu0 0.0
        %1653 = vmatprep.subr.mxu0 0.0
        %1654 = vmatpush1.msra.mxu0 0.0
        %1655 = vmatprep.subr.mxu0 0.0
        %1656 = vmatpush1.msra.mxu0 0.0
        %1657 = vmatprep.subr.mxu0 0.0
        %1658 = vmatpush1.msra.mxu0 0.0
        %1659 = vmatprep.subr.mxu0 %v1627
        %1660 = vmatpush1.msra.mxu0 %v1625
        %1661 = vmatprep.subr.mxu0 0.0
        %1662 = vmatpush2.msra.mxu0 0.0
        %1663 = vmatprep.subr.mxu0 0.0
        %1664 = vmatpush2.msra.mxu0 0.0
        %1665 = vmatprep.subr.mxu0 0.0
        %1666 = vmatpush2.msra.mxu0 0.0
        %1667 = vmatprep.subr.mxu0 0.0
        %1668 = vmatpush2.msra.mxu0 0.0
        %1669 = vmatprep.subr.mxu0 0.0
        %1670 = vmatpush2.msra.mxu0 0.0
        %1671 = vmatprep.subr.mxu0 0.0
        %1672 = vmatpush2.msra.mxu0 0.0
        %1673 = vmatprep.subr.mxu0 0.0
        %1674 = vmatpush2.msra.mxu0 0.0
        %1675 = vmatprep.subr.mxu0 0.0
        %1676 = vmatpush2.msra.mxu0 0.0
        %1677 = vmatprep.subr.mxu0 0.0
        %1678 = vmatpush2.msra.mxu0 0.0
        %1679 = vmatprep.subr.mxu0 0.0
        %1680 = vmatpush2.msra.mxu0 0.0
        %1681 = vmatprep.subr.mxu0 0.0
        %1682 = vmatpush2.msra.mxu0 0.0
        %1683 = vmatprep.subr.mxu0 0.0
        %1684 = vmatpush2.msra.mxu0 0.0
        %1685 = vmatprep.subr.mxu0 0.0
        %1686 = vmatpush2.msra.mxu0 0.0
        %1687 = vmatprep.subr.mxu0 0.0
        %1688 = vmatpush2.msra.mxu0 0.0
        %1689 = vmatprep.subr.mxu0 0.0
        %1690 = vmatpush2.msra.mxu0 0.0
        %1691 = vmatprep.subr.mxu0 0.0
        %1692 = vmatpush2.msra.mxu0 0.0
        %1693 = vmatprep.mubr.f32.mxu0 0.0
        %1694 = vmatmul.mubr.f32.gmra.mxu0 %v1623
        %v1695 = vpop.f32.mrf.mxu0
        %v1696 = vadd.f32 %v1610, %v1695
        %v1697 = vpop.f32.mrf.mxu0
        %v1698 = vadd.f32 %v1612, %v1697
        %1699 = vdwg.mxu0
        %s1700 = scalar_lea.vmem %s7, 8
        %v1701 = vld [vmem:[%s1700] sm:$0xf]
        %1702 = vrot.lane.b32.xlu0 %v1517, 124
        %v1703 = vpop.permute.xlu0 %1702
        %1704 = vrot.lane.b32.xlu0 %v1518, 124
        %v1705 = vpop.permute.xlu0 %1704
        %1706 = vrot.lane.b32.xlu0 %v1519, 124
        %v1707 = vpop.permute.xlu0 %1706
        %vm1708 = vcmask 1014784
        %v1709 = vsel %vm1708, %v1703, %v1705
        %v1710 = vsel %vm1708, %v1705, %v1707
        %v1712 = vsel %vm1534, %v1701, 0
        %v1714 = vsel %vm1538, %v1709, 0
        %v1716 = vsel %vm1538, %v1710, 0
        %1718 = vmatprep.subr.mxu0 0.0
        %1719 = vmatpush1.msra.mxu0 0.0
        %1720 = vmatprep.subr.mxu0 0.0
        %1721 = vmatpush1.msra.mxu0 0.0
        %1722 = vmatprep.subr.mxu0 0.0
        %1723 = vmatpush1.msra.mxu0 0.0
        %1724 = vmatprep.subr.mxu0 0.0
        %1725 = vmatpush1.msra.mxu0 0.0
        %1726 = vmatprep.subr.mxu0 0.0
        %1727 = vmatpush1.msra.mxu0 0.0
        %1728 = vmatprep.subr.mxu0 0.0
        %1729 = vmatpush1.msra.mxu0 0.0
        %1730 = vmatprep.subr.mxu0 0.0
        %1731 = vmatpush1.msra.mxu0 0.0
        %1732 = vmatprep.subr.mxu0 0.0
        %1733 = vmatpush1.msra.mxu0 0.0
        %1734 = vmatprep.subr.mxu0 0.0
        %1735 = vmatpush1.msra.mxu0 0.0
        %1736 = vmatprep.subr.mxu0 0.0
        %1737 = vmatpush1.msra.mxu0 0.0
        %1738 = vmatprep.subr.mxu0 0.0
        %1739 = vmatpush1.msra.mxu0 0.0
        %1740 = vmatprep.subr.mxu0 0.0
        %1741 = vmatpush1.msra.mxu0 0.0
        %1742 = vmatprep.subr.mxu0 0.0
        %1743 = vmatpush1.msra.mxu0 0.0
        %1744 = vmatprep.subr.mxu0 0.0
        %1745 = vmatpush1.msra.mxu0 0.0
        %1746 = vmatprep.subr.mxu0 0.0
        %1747 = vmatpush1.msra.mxu0 0.0
        %1748 = vmatprep.subr.mxu0 %v1716
        %1749 = vmatpush1.msra.mxu0 %v1714
        %1750 = vmatprep.subr.mxu0 0.0
        %1751 = vmatpush2.msra.mxu0 0.0
        %1752 = vmatprep.subr.mxu0 0.0
        %1753 = vmatpush2.msra.mxu0 0.0
        %1754 = vmatprep.subr.mxu0 0.0
        %1755 = vmatpush2.msra.mxu0 0.0
        %1756 = vmatprep.subr.mxu0 0.0
        %1757 = vmatpush2.msra.mxu0 0.0
        %1758 = vmatprep.subr.mxu0 0.0
        %1759 = vmatpush2.msra.mxu0 0.0
        %1760 = vmatprep.subr.mxu0 0.0
        %1761 = vmatpush2.msra.mxu0 0.0
        %1762 = vmatprep.subr.mxu0 0.0
        %1763 = vmatpush2.msra.mxu0 0.0
        %1764 = vmatprep.subr.mxu0 0.0
        %1765 = vmatpush2.msra.mxu0 0.0
        %1766 = vmatprep.subr.mxu0 0.0
        %1767 = vmatpush2.msra.mxu0 0.0
        %1768 = vmatprep.subr.mxu0 0.0
        %1769 = vmatpush2.msra.mxu0 0.0
        %1770 = vmatprep.subr.mxu0 0.0
        %1771 = vmatpush2.msra.mxu0 0.0
        %1772 = vmatprep.subr.mxu0 0.0
        %1773 = vmatpush2.msra.mxu0 0.0
        %1774 = vmatprep.subr.mxu0 0.0
        %1775 = vmatpush2.msra.mxu0 0.0
        %1776 = vmatprep.subr.mxu0 0.0
        %1777 = vmatpush2.msra.mxu0 0.0
        %1778 = vmatprep.subr.mxu0 0.0
        %1779 = vmatpush2.msra.mxu0 0.0
        %1780 = vmatprep.subr.mxu0 0.0
        %1781 = vmatpush2.msra.mxu0 0.0
        %1782 = vmatprep.mubr.f32.mxu0 0.0
        %1783 = vmatmul.mubr.f32.gmra.mxu0 %v1712
        %v1784 = vpop.f32.mrf.mxu0
        %v1785 = vadd.f32 0.0, %v1784
        %v1786 = vpop.f32.mrf.mxu0
        %v1787 = vadd.f32 0.0, %v1786
        %1788 = vdwg.mxu0
        %v1789 = vadd.f32 %v1696, %v1785
        %v1790 = vadd.f32 %v1698, %v1787
        %v1791 = vld [vmem:[%s8] sm:$0xf]
        %1793 = vset.pattern.permute.xlu0 0
        %1794 = vperm.xlu0 %1793, %v1791
        %v1795 = vpop.permute.xlu0 %1794
        %v1797 = vadd.f32 %v1789, %v1795
        %v1798 = vadd.f32 %v1790, %v1795
        %v1799 = vsub.f32 %v1797, 5.0
        %v1800 = vsub.f32 %v1798, 5.0
        %v1801 = vxor.u32 %v1799, 2147483648
        %v1802 = vxor.u32 %v1800, 2147483648
        %v1803 = vmul.f32 %v1801, 1.442695
        %v1804 = vpow.pop %v1803
        %v1805 = vmul.f32 %v1802, 1.442695
        %v1806 = vpow.pop %v1805
        %v1807 = vadd.f32 %v1804, 1.0
        %v1808 = vadd.f32 %v1806, 1.0
        %v1809 = vrcp.pop %v1807
        %v1810 = vmul.f32 1.0, %v1809
        %v1811 = vrcp.pop %v1808
        %v1812 = vmul.f32 1.0, %v1811
        %v1813 = vld [vmem:[%s451] sm:$0xf]
        %1816 = vrot.lane.b32.xlu0 %v1810, 3
        %v1817 = vpop.permute.xlu0 %1816
        %1818 = vrot.lane.b32.xlu0 %v1812, 3
        %v1819 = vpop.permute.xlu0 %1818
        %vm1820 = vcmask 23552
        %v1821 = vsel %vm1820, %v1817, %v1819
        %v1823 = vmul.f32 %v1813, %v1821
        %v1824 = vsel %vm1538, %v1823, 0.0
        %v1825 = vrot.slane %v1824, 4
        %v1826 = vadd.f32 %v1824, %v1825
        %v1827 = vrot.slane %v1826, 2
        %v1828 = vadd.f32 %v1826, %v1827
        %v1829 = vrot.slane %v1828, 1
        %v1830 = vadd.f32 %v1828, %v1829
        %1831 = vst [vmem:[%s434] sm:$0x1] %v1830
        %s1832 = sand.u32 %s255, 1
        %s1833 = scalar_lea.sflag [#allocation4], %s1832
        %s1834 = sand.u32 %s255, 1
        %s1835 = scalar_lea.vmem [#allocation3], %s1834
        // Predicated region
        $region95: #{noise_generator.1} parent=89 // pred_check
          %p1836 = pneg %p265
        $region96: #{noise_generator.1} parent=89 // pred_check_branch
          %1838 = sbr.rel (%p1836) target = $region98
        $region97: #{noise_generator.1} parent=89 // pred_region
          %s1840 = ssub.s32 16, 16
          %1841 = vsyncadd %s1833, %s1840
          %s1842 = smul.addr %s27, 3
          %s1843 = sadd.s32 %s28, %s1842
          %s1844 = smul.addr %s1843, 16
          %s1845 = scalar_lea.hbm %s9, %s1844
          %s1847 = sshll.u32 %s1835, 4
          %s1848 = int_to_ptr.vmem [resolvable:$true] %s1847
          %1850 = dma.vmem_to_hbm [thread:$0]  %s1848, 16, %s1845, %s1833
        $region98: #{noise_generator.1} parent=89 // pred_fallthru
          _
      $region90: #{noise_generator.1} parent=5 // pred_fallthru
        _
      %p1851 = scmp.le.s32.totalorder 2, %s18
      // Predicated region
      $region99: #{noise_generator.1} parent=5 // pred_check
        %p1852 = pneg %p1851
      $region100: #{noise_generator.1} parent=5 // pred_check_branch
        %1854 = sbr.rel (%p1852) target = $region102
      $region101: #{noise_generator.1} parent=5 // pred_region
        %s1855 = ssub.s32 %s18, 2
        // Predicated region
        $region103: #{noise_generator.1} parent=101 // pred_check
          %p1856 = pneg %p271
        $region104: #{noise_generator.1} parent=101 // pred_check_branch
          %1858 = sbr.rel (%p1856) target = $region106
        $region105: #{noise_generator.1} parent=101 // pred_region
          %s1859 = sand.u32 %s256, 1
          %s1860 = scalar_lea.sflag [#allocation4], %s1859
          %s1861 = sand.u32 %s256, 1
          %s1862 = scalar_lea.vmem [#allocation3], %s1861
          %1863 = dma.done %s1860, 16
        $region106: #{noise_generator.1} parent=101 // pred_fallthru
          _
      $region102: #{noise_generator.1} parent=5 // pred_fallthru
        _
    $region6: #{noise_generator.1} parent=1 // loop_footer
      %s22 = sadd.s32 1, %s18
    $region7: #{noise_generator.1} parent=1 // loop_footer_branch
      %17 = sbr.rel target = $region3
    $region8: #{noise_generator.1} parent=1 // loop_exit
      _
    %1864 = vsyncpa [#allocation4], 1
    %s1865 = scalar_lea.sflag [#allocation4], 1
    %1866 = vsyncpa %s1865, 1

</llo_original>
